<compile_context>
chip_gen: v5e
topology: v5e:2x2
jax: 0.10.0
libtpu: 0.0.40
codegen_flags: <defaults>
</compile_context>

<pallas_src>
import numpy as np
import jax
import jax.numpy as jnp
from jax import lax
from jax.experimental import pallas as pl
from jax.experimental.pallas import tpu as pltpu

EPS = 1e-5
_INV_SQRT2 = 0.7071067811865476
_SQRT_2_OVER_PI = 0.7978845608028654


def _gelu(v, approx=False):
    if approx:
        # tanh approximation lowers to the EUP slot (nearly free when VALU-bound)
        return 0.5 * v * (1.0 + jnp.tanh(_SQRT_2_OVER_PI * (v + 0.044715 * v * v * v)))
    # exact GELU, matches torch.nn.GELU(approximate='none')
    return 0.5 * v * (1.0 + lax.erf(v * _INV_SQRT2))


# --------------------------------------------------------------------------- #
# Host-side weight packing (numpy, done ONCE per module in make_resblock_forward)
# --------------------------------------------------------------------------- #

def _band_conv_weights(w_hwio, W):
    """(3,3,Ci,Co) -> (W*Ci, 3*W*Co): the three row-bands A_0 | A_1 | A_2 concatenated
    along the OUTPUT axis.  'SAME' column boundaries are baked in by omitting
    out-of-range column taps, so no width padding exists anywhere.

    With activations as lane-dense (rows, W*Ci) slabs, P = dot(act, A) gives the three
    row partials side by side; output row r = P1[r] + P0[r-1] + P2[r+1] (zero rows at
    the image top/bottom), i.e. one MXU push per conv + two small sublane shift-adds.
    """
    kh, kw, Ci, Co = w_hwio.shape
    A = np.zeros((kh, W * Ci, W * Co), np.float32)
    for di in range(kh):
        for dj in range(kw):
            for j in range(W):
                jj = j + dj - 1              # input column feeding output column j
                if 0 <= jj < W:
                    A[di, jj * Ci:(jj + 1) * Ci, j * Co:(j + 1) * Co] = w_hwio[di, dj]
    return np.concatenate([A[0], A[1], A[2]], axis=1)


def _blockdiag_1x1(wp, W):
    """1x1-conv weight (Ci,Co) -> block-diagonal (W*Ci, W*Co) so the residual projection
    is a single lane-dense matmul (toy-size regime only)."""
    Ci, Co = wp.shape
    M = np.zeros((W * Ci, W * Co), np.float32)
    for j in range(W):
        M[j * Ci:(j + 1) * Ci, j * Co:(j + 1) * Co] = wp
    return M


def _channel_sum_map(C, W):
    """0/1 matrix (W*C, C): dot(row_(1,W*C), M) reduces per-(col,channel) sums to
    per-channel sums without any cross-lane relayout."""
    M = np.zeros((W * C, C), np.float32)
    for j in range(W):
        M[j * C + np.arange(C), np.arange(C)] = 1.0
    return M


def _tile_bias(b, W):
    C = int(b.shape[-1])
    return np.tile(np.asarray(b, np.float32).reshape(1, C), (1, W))


# --------------------------------------------------------------------------- #
# Kernels
# --------------------------------------------------------------------------- #

def _make_conv1_stats_kernel(H, WCm, approx_gelu):
    """Phase 1: y1 = conv1(GELU(x)) per image; accumulate per-channel sum / sumsq
    across the image grid into a resident (2, Cmid) output (P3 accumulator pattern).
    NOTE: conv1's bias is intentionally omitted — training-mode BN cancels it exactly."""

    def kernel(x_ref, a1_ref, csum_ref, y1_ref, stats_ref):
        n = pl.program_id(0)

        # GELU on the lane-dense image block, cast to bf16 ONCE for the MXU.
        g = _gelu(x_ref[0], approx_gelu).astype(jnp.bfloat16)          # (H, W*Cin)

        # One MXU matmul against the 3 concatenated row-bands (K = W*Cin).
        p = jnp.dot(g, a1_ref[...], preferred_element_type=jnp.float32)  # (H, 3*WCm)

        # Row-halo via shift-add of output partials (two small sublane shifts).
        zrow = jnp.zeros((1, WCm), jnp.float32)
        y1 = (p[:, WCm:2 * WCm]
              + jnp.concatenate([zrow, p[:H - 1, :WCm]], axis=0)
              + jnp.concatenate([p[1:, 2 * WCm:], zrow], axis=0))        # (H, WCm) f32

        y1_ref[0] = y1   # lane-dense store (last dim = W*Cmid, multiple of 128)

        # Per-channel batch statistics (sum, sum of squares) via the tiny 0/1 map.
        s = jnp.concatenate([jnp.sum(y1, axis=0, keepdims=True),
                             jnp.sum(y1 * y1, axis=0, keepdims=True)], axis=0)  # (2, WCm)
        sc = jnp.dot(s, csum_ref[...], preferred_element_type=jnp.float32)      # (2, Cmid)

        @pl.when(n == 0)
        def _():
            stats_ref[...] = jnp.zeros_like(stats_ref)

        stats_ref[...] += sc

    return kernel


def _make_bn_conv2_kernel(H, WCo, has_proj, approx_gelu):
    """Phase 2: BN apply (precomputed per-lane scale/shift) -> GELU -> Dropout(p=0) ->
    conv2 -> + residual (identity or block-diagonal 1x1 projection). Fully parallel
    over the image grid."""

    def kernel(y1_ref, scale_ref, shift_ref, a2_ref, b2_ref, x_ref, *rest):
        if has_proj:
            wp_ref, bp_ref, o_ref = rest
        else:
            (o_ref,) = rest

        # BN apply + GELU; Dropout p=0.0 -> identity.
        # TODO(synk): Dropout with p > 0 not implemented (module default p=0.0).
        h = _gelu(y1_ref[0] * scale_ref[...] + shift_ref[...], approx_gelu)  # (H, WCm)

        # conv2: one MXU matmul against the 3 concatenated row-bands.
        p = jnp.dot(h.astype(jnp.bfloat16), a2_ref[...],
                    preferred_element_type=jnp.float32)                     # (H, 3*WCo)
        zrow = jnp.zeros((1, WCo), jnp.float32)
        y2 = (p[:, WCo:2 * WCo]
              + jnp.concatenate([zrow, p[:H - 1, :WCo]], axis=0)
              + jnp.concatenate([p[1:, 2 * WCo:], zrow], axis=0)
              + b2_ref[...])

        # Residual: identity (no matmul, no weight DMA) or 1x1 projection.
        xb = x_ref[0]                                                        # (H, W*Cin)
        if has_proj:
            res = jnp.dot(xb.astype(jnp.bfloat16), wp_ref[...],
                          preferred_element_type=jnp.float32) + bp_ref[...]
        else:
            res = xb

        o_ref[0] = (y2 + res).astype(o_ref.dtype)   # lane-dense (W*Cout) store

    return kernel


# --------------------------------------------------------------------------- #
# Builder / wrapper (packs weights once, returns a jitted forward fn)
# --------------------------------------------------------------------------- #

def make_resblock_forward(params, x_shape, approx_gelu=False):
    """Pack weights once and return forward(x_nchw) -> (N, Cout, H, W)."""
    w1, b1, gamma, beta, w2, b2, wp, bp = params
    N, Cin, H, W = map(int, x_shape)
    Cmid = int(w1.shape[-1])
    Cout = int(w2.shape[-1])
    has_proj = wp is not None
    WCi, WCm, WCo = W * Cin, W * Cmid, W * Cout
    inv_R = 1.0 / float(N * H * W)

    # ---- host-side packing (once per module, NOT per forward) ----------------
    a1 = jnp.asarray(_band_conv_weights(np.asarray(w1, np.float32), W), jnp.bfloat16)
    a2 = jnp.asarray(_band_conv_weights(np.asarray(w2, np.float32), W), jnp.bfloat16)
    csum = jnp.asarray(_channel_sum_map(Cmid, W))              # f32, exact sums
    b2_t = jnp.asarray(_tile_bias(b2, W))
    gamma_j = jnp.asarray(gamma, jnp.float32)
    beta_j = jnp.asarray(beta, jnp.float32)
    if has_proj:
        wp_m = jnp.asarray(_blockdiag_1x1(np.asarray(wp, np.float32), W), jnp.bfloat16)
        bp_t = jnp.asarray(_tile_bias(bp, W))
    # conv1 bias b1 intentionally unused: training-mode BN cancels it exactly.

    # ---- VMEM budget: query the chip, leave headroom (no hard-coded 64 MiB) --
    try:
        vmem_cap = int(pltpu.get_tpu_info().vmem_capacity_bytes)
    except Exception:
        vmem_cap = 128 * 1024 * 1024
    vmem_limit = min(vmem_cap * 3 // 4, 96 * 1024 * 1024)

    const2 = lambda n: (0, 0)          # resident constants (not re-DMA'd per step)
    img3 = lambda n: (n, 0, 0)         # streamed per-image activation blocks

    # ---- phase 1: conv1 + batch statistics ------------------------------------
    conv1_call = pl.pallas_call(
        _make_conv1_stats_kernel(H, WCm, approx_gelu),
        grid=(N,),
        in_specs=[
            pl.BlockSpec((1, H, WCi), img3),        # x          (streams, pipelined)
            pl.BlockSpec((WCi, 3 * WCm), const2),   # banded conv1 weights (resident)
            pl.BlockSpec((WCm, Cmid), const2),      # per-channel sum map (resident)
        ],
        out_specs=(
            pl.BlockSpec((1, H, WCm), img3),        # y1 (streams out)
            pl.BlockSpec((2, Cmid), const2),        # stats accumulator (resident)
        ),
        out_shape=(
            jax.ShapeDtypeStruct((N, H, WCm), jnp.float32),
            jax.ShapeDtypeStruct((2, Cmid), jnp.float32),
        ),
        compiler_params=pltpu.CompilerParams(
            dimension_semantics=("arbitrary",),     # carries the stats accumulator
            vmem_limit_bytes=vmem_limit),
    )

    # ---- phase 2: BN apply + GELU + conv2 + residual ---------------------------
    in_specs2 = [
        pl.BlockSpec((1, H, WCm), img3),            # y1
        pl.BlockSpec((1, WCm), const2),             # per-lane BN scale
        pl.BlockSpec((1, WCm), const2),             # per-lane BN shift
        pl.BlockSpec((WCm, 3 * WCo), const2),       # banded conv2 weights
        pl.BlockSpec((1, WCo), const2),             # conv2 bias (tiled per lane)
        pl.BlockSpec((1, H, WCi), img3),            # x (residual)
    ]
    if has_proj:
        in_specs2 += [
            pl.BlockSpec((WCi, WCo), const2),       # block-diagonal 1x1 projection
            pl.BlockSpec((1, WCo), const2),         # projection bias
        ]

    conv2_call = pl.pallas_call(
        _make_bn_conv2_kernel(H, WCo, has_proj, approx_gelu),
        grid=(N,),
        in_specs=in_specs2,
        out_specs=pl.BlockSpec((1, H, WCo), img3),
        out_shape=jax.ShapeDtypeStruct((N, H, WCo), jnp.float32),
        compiler_params=pltpu.CompilerParams(
            dimension_semantics=("parallel",),      # independent per image -> 2 TCs on v7x
            vmem_limit_bytes=vmem_limit),
    )

    @jax.jit
    def forward(x_nchw):
        # NCHW -> lane-dense (N, H, W*Cin); no halo padding anywhere (baked into weights).
        x = jnp.transpose(x_nchw, (0, 2, 3, 1)).astype(jnp.float32).reshape(N, H, WCi)

        y1, stats = conv1_call(x, a1, csum)

        # Tiny per-channel BN math in XLA between the two kernels (Cmid elements).
        mean = stats[0] * inv_R
        var = jnp.maximum(stats[1] * inv_R - mean * mean, 0.0)   # clamp vs cancellation
        scale = gamma_j * lax.rsqrt(var + EPS)
        shift = beta_j - mean * scale
        scale_t = jnp.tile(scale.reshape(1, Cmid), (1, W))        # per-lane layout j*C+c
        shift_t = jnp.tile(shift.reshape(1, Cmid), (1, W))

        args = [y1, scale_t, shift_t, a2, b2_t, x]
        if has_proj:
            args += [wp_m, bp_t]
        out = conv2_call(*args)

        # lane-dense (N, H, W*Cout) -> NCHW (cheap XLA layout plumbing)
        return jnp.transpose(out.reshape(N, H, W, Cout), (0, 3, 1, 2))

    return forward


# --------------------------------------------------------------------------- #
# Parameters + pure-JAX reference
# --------------------------------------------------------------------------- #

def init_params(key, in_channels, out_channels, mid_channels=None):
    """Deterministic synthetic parameters in natural (HWIO) layout."""
    if mid_channels is None:
        mid_channels = out_channels
    ks = jax.random.split(key, 8)
    w1 = 0.1 * jax.random.normal(ks[0], (3, 3, in_channels, mid_channels), jnp.float32)
    b1 = 0.1 * jax.random.normal(ks[1], (mid_channels,), jnp.float32)
    gamma = 1.0 + 0.1 * jax.random.normal(ks[2], (mid_channels,), jnp.float32)
    beta = 0.1 * jax.random.normal(ks[3], (mid_channels,), jnp.float32)
    w2 = 0.1 * jax.random.normal(ks[4], (3, 3, mid_channels, out_channels), jnp.float32)
    b2 = 0.1 * jax.random.normal(ks[5], (out_channels,), jnp.float32)
    if in_channels == out_channels:
        wp, bp = None, None                                   # nn.Identity()
    else:
        wp = 0.1 * jax.random.normal(ks[6], (in_channels, out_channels), jnp.float32)
        bp = 0.1 * jax.random.normal(ks[7], (out_channels,), jnp.float32)
    return (w1, b1, gamma, beta, w2, b2, wp, bp)


def resblock_ref(x_nchw, params, approx_gelu=False):
    """Pure-JAX reference (XLA convs, f32 HIGHEST precision) for correctness."""
    w1, b1, gamma, beta, w2, b2, wp, bp = params
    dn = ('NHWC', 'HWIO', 'NHWC')
    x = jnp.transpose(x_nchw, (0, 2, 3, 1)).astype(jnp.float32)

    g = _gelu(x, approx_gelu)
    y = lax.conv_general_dilated(g, w1, (1, 1), 'SAME', dimension_numbers=dn,
                                 precision=lax.Precision.HIGHEST) + b1
    mean = jnp.mean(y, axis=(0, 1, 2), keepdims=True)
    var = jnp.mean((y - mean) ** 2, axis=(0, 1, 2), keepdims=True)
    y = (y - mean) * lax.rsqrt(var + EPS) * gamma + beta
    h2 = _gelu(y, approx_gelu)
    y2 = lax.conv_general_dilated(h2, w2, (1, 1), 'SAME', dimension_numbers=dn,
                                  precision=lax.Precision.HIGHEST) + b2
    if wp is None:
        proj = x
    else:
        proj = jnp.einsum('nhwc,cf->nhwf', x, wp,
                          precision=lax.Precision.HIGHEST) + bp
    return jnp.transpose(proj + y2, (0, 3, 1, 2))


if __name__ == "__main__":
    key = jax.random.PRNGKey(0)
    kx1, kx2, kp1, kp2 = jax.random.split(key, 4)

    # Tolerance note: the kernels feed bf16 operands to the MXU (f32 accumulate)
    # while the reference runs f32 HIGHEST, so allow ~2e-2.
    RTOL = ATOL = 2e-2

    # Case 1: in_channels != out_channels  ->  1x1-conv projection path
    N, Cin, Cout, H, W = 2, 4, 8, 16, 16
    x = jax.random.normal(kx1, (N, Cin, H, W), jnp.float32)
    params = init_params(kp1, Cin, Cout)
    fwd = make_resblock_forward(params, x.shape)
    out = jax.block_until_ready(fwd(x))
    ref = jax.block_until_ready(resblock_ref(x, params))
    np.testing.assert_allclose(np.asarray(out), np.asarray(ref), rtol=RTOL, atol=ATOL)

    # Case 2: in_channels == out_channels  ->  nn.Identity() residual (proj matmul skipped)
    Cio = 8
    x2 = jax.random.normal(kx2, (N, Cio, H, W), jnp.float32)
    params2 = init_params(kp2, Cio, Cio)
    fwd2 = make_resblock_forward(params2, x2.shape)
    out2 = jax.block_until_ready(fwd2(x2))
    ref2 = jax.block_until_ready(resblock_ref(x2, params2))
    np.testing.assert_allclose(np.asarray(out2), np.asarray(ref2), rtol=RTOL, atol=ATOL)

    print("KERNEL_OK")
</pallas_src>

<mosaic_0001>
module attributes {stable_mosaic.version = 11 : i64} {
  func.func @kernel(%arg0: i32, %arg1: memref<1x16x64xf32, #tpu.memory_space<vmem>>, %arg2: memref<64x384xbf16, #tpu.memory_space<vmem>>, %arg3: memref<128x8xf32, #tpu.memory_space<vmem>>, %arg4: memref<1x16x128xf32, #tpu.memory_space<vmem>>, %arg5: memref<2x8xf32, #tpu.memory_space<vmem>>) attributes {dimension_semantics = [#tpu.dimension_semantics<arbitrary>], iteration_bounds = array<i64: 2>, scalar_prefetch = 0 : i64, scratch_operands = 0 : i64, tpu.core_type = #tpu.core_type<tc>, window_params = [{transform_indices = @transform_0, window_bounds = array<i64: 1, 16, 64>}, {pipeline_mode = #tpu.pipeline_mode<synchronous>, transform_indices = @transform_1, window_bounds = array<i64: 64, 384>}, {pipeline_mode = #tpu.pipeline_mode<synchronous>, transform_indices = @transform_2, window_bounds = array<i64: 128, 8>}, {transform_indices = @transform_3, window_bounds = array<i64: 1, 16, 128>}, {pipeline_mode = #tpu.pipeline_mode<synchronous>, transform_indices = @transform_4, window_bounds = array<i64: 2, 8>}]} {
    %c0 = arith.constant 0 : index
    %c0_0 = arith.constant 0 : index
    %c0_1 = arith.constant 0 : index
    %0 = vector.load %arg1[%c0, %c0_0, %c0_1] : memref<1x16x64xf32, #tpu.memory_space<vmem>>, vector<1x16x64xf32>
    %1 = vector.shape_cast %0 : vector<1x16x64xf32> to vector<16x64xf32>
    %cst = arith.constant 5.000000e-01 : f32
    %2 = vector.broadcast %cst : f32 to vector<16x64xf32>
    %3 = arith.mulf %2, %1 : vector<16x64xf32>
    %cst_2 = arith.constant 0.707106769 : f32
    %4 = vector.broadcast %cst_2 : f32 to vector<16x64xf32>
    %5 = arith.mulf %1, %4 : vector<16x64xf32>
    %6 = math.erf %5 : vector<16x64xf32>
    %cst_3 = arith.constant 1.000000e+00 : f32
    %7 = vector.broadcast %cst_3 : f32 to vector<16x64xf32>
    %8 = arith.addf %7, %6 : vector<16x64xf32>
    %9 = arith.mulf %3, %8 : vector<16x64xf32>
    %10 = arith.truncf %9 : vector<16x64xf32> to vector<16x64xbf16>
    %c0_4 = arith.constant 0 : index
    %c0_5 = arith.constant 0 : index
    %11 = vector.load %arg2[%c0_4, %c0_5] : memref<64x384xbf16, #tpu.memory_space<vmem>>, vector<64x384xbf16>
    %cst_6 = arith.constant dense<0.000000e+00> : vector<16x384xf32>
    %12 = tpu.matmul %10, %11, %cst_6 {dimension_numbers = #tpu.dot_dimension_numbers<[1], [0], [0], [1], [0, 0, 1, 1], [], []>} : vector<16x64xbf16>, vector<64x384xbf16>, vector<16x384xf32> -> vector<16x384xf32>
    %cst_7 = arith.constant 0.000000e+00 : f32
    %13 = vector.broadcast %cst_7 : f32 to vector<1x128xf32>
    %14 = vector.extract_strided_slice %12 {offsets = [0, 128], sizes = [16, 128], strides = [1, 1]} : vector<16x384xf32> to vector<16x128xf32>
    %15 = vector.extract_strided_slice %12 {offsets = [0, 0], sizes = [15, 128], strides = [1, 1]} : vector<16x384xf32> to vector<15x128xf32>
    %16 = tpu.concatenate %13, %15 in 0 : vector<1x128xf32>, vector<15x128xf32> -> vector<16x128xf32>
    %17 = arith.addf %14, %16 : vector<16x128xf32>
    %18 = vector.extract_strided_slice %12 {offsets = [1, 256], sizes = [15, 128], strides = [1, 1]} : vector<16x384xf32> to vector<15x128xf32>
    %19 = tpu.concatenate %18, %13 in 0 : vector<15x128xf32>, vector<1x128xf32> -> vector<16x128xf32>
    %20 = arith.addf %17, %19 : vector<16x128xf32>
    %c0_8 = arith.constant 0 : index
    %c0_9 = arith.constant 0 : index
    %c0_10 = arith.constant 0 : index
    %21 = vector.load %arg4[%c0_8, %c0_9, %c0_10] : memref<1x16x128xf32, #tpu.memory_space<vmem>>, vector<1x16x128xf32>
    %22 = vector.shape_cast %21 : vector<1x16x128xf32> to vector<16x128xf32>
    %23 = vector.shape_cast %20 : vector<16x128xf32> to vector<1x16x128xf32>
    tpu.vector_store %arg4[%c0_8, %c0_9, %c0_10], %23 {strides = array<i32>} : memref<1x16x128xf32, #tpu.memory_space<vmem>>, vector<1x16x128xf32>,
    %cst_11 = arith.constant dense<0.000000e+00> : vector<128xf32>
    %24 = vector.multi_reduction <add>, %20, %cst_11 [0] : vector<16x128xf32> to vector<128xf32>
    %25 = vector.shape_cast %24 : vector<128xf32> to vector<1x128xf32>
    %26 = arith.mulf %20, %20 : vector<16x128xf32>
    %cst_12 = arith.constant dense<0.000000e+00> : vector<128xf32>
    %27 = vector.multi_reduction <add>, %26, %cst_12 [0] : vector<16x128xf32> to vector<128xf32>
    %28 = vector.shape_cast %27 : vector<128xf32> to vector<1x128xf32>
    %29 = tpu.concatenate %25, %28 in 0 : vector<1x128xf32>, vector<1x128xf32> -> vector<2x128xf32>
    %c0_13 = arith.constant 0 : index
    %c0_14 = arith.constant 0 : index
    %30 = vector.load %arg3[%c0_13, %c0_14] : memref<128x8xf32, #tpu.memory_space<vmem>>, vector<128x8xf32>
    %cst_15 = arith.constant dense<0.000000e+00> : vector<2x8xf32>
    %31 = tpu.matmul %29, %30, %cst_15 {dimension_numbers = #tpu.dot_dimension_numbers<[1], [0], [0], [1], [0, 0, 1, 1], [], []>} : vector<2x128xf32>, vector<128x8xf32>, vector<2x8xf32> -> vector<2x8xf32>
    %c0_i32 = arith.constant 0 : i32
    %32 = arith.cmpi eq, %arg0, %c0_i32 : i32
    %33 = arith.extui %32 : i1 to i32
    %c0_i32_16 = arith.constant 0 : i32
    %34 = arith.cmpi ne, %33, %c0_i32_16 : i32
    scf.if %34 {
      %cst_21 = arith.constant 0.000000e+00 : f32
      %38 = vector.broadcast %cst_21 : f32 to vector<2x8xf32>
      %c0_22 = arith.constant 0 : index
      %c0_23 = arith.constant 0 : index
      %39 = vector.load %arg5[%c0_22, %c0_23] : memref<2x8xf32, #tpu.memory_space<vmem>>, vector<2x8xf32>
      tpu.vector_store %arg5[%c0_22, %c0_23], %38 {strides = array<i32>} : memref<2x8xf32, #tpu.memory_space<vmem>>, vector<2x8xf32>,
    } else {
    }
    %c0_17 = arith.constant 0 : index
    %c0_18 = arith.constant 0 : index
    %35 = vector.load %arg5[%c0_17, %c0_18] : memref<2x8xf32, #tpu.memory_space<vmem>>, vector<2x8xf32>
    %36 = arith.addf %35, %31 : vector<2x8xf32>
    %c0_19 = arith.constant 0 : index
    %c0_20 = arith.constant 0 : index
    %37 = vector.load %arg5[%c0_19, %c0_20] : memref<2x8xf32, #tpu.memory_space<vmem>>, vector<2x8xf32>
    tpu.vector_store %arg5[%c0_19, %c0_20], %36 {strides = array<i32>} : memref<2x8xf32, #tpu.memory_space<vmem>>, vector<2x8xf32>,
    return
  }
  func.func @transform_0(%arg0: i32) -> (i32, i32, i32) {
    %c0_i32 = arith.constant 0 : i32
    %c0_i32_0 = arith.constant 0 : i32
    %c0_i32_1 = arith.constant 0 : i32
    return %arg0, %c0_i32, %c0_i32_0 : i32, i32, i32
  }
  func.func @transform_1(%arg0: i32) -> (i32, i32) {
    %c0_i32 = arith.constant 0 : i32
    %c0_i32_0 = arith.constant 0 : i32
    %c0_i32_1 = arith.constant 0 : i32
    return %c0_i32, %c0_i32_0 : i32, i32
  }
  func.func @transform_2(%arg0: i32) -> (i32, i32) {
    %c0_i32 = arith.constant 0 : i32
    %c0_i32_0 = arith.constant 0 : i32
    %c0_i32_1 = arith.constant 0 : i32
    return %c0_i32, %c0_i32_0 : i32, i32
  }
  func.func @transform_3(%arg0: i32) -> (i32, i32, i32) {
    %c0_i32 = arith.constant 0 : i32
    %c0_i32_0 = arith.constant 0 : i32
    %c0_i32_1 = arith.constant 0 : i32
    return %arg0, %c0_i32, %c0_i32_0 : i32, i32, i32
  }
  func.func @transform_4(%arg0: i32) -> (i32, i32) {
    %c0_i32 = arith.constant 0 : i32
    %c0_i32_0 = arith.constant 0 : i32
    %c0_i32_1 = arith.constant 0 : i32
    return %c0_i32, %c0_i32_0 : i32, i32
  }
}

module attributes {stable_mosaic.version = 11 : i64} {
  func.func @kernel(%arg0: i32, %arg1: memref<1x16x128xf32, #tpu.memory_space<vmem>>, %arg2: memref<1x128xf32, #tpu.memory_space<vmem>>, %arg3: memref<1x128xf32, #tpu.memory_space<vmem>>, %arg4: memref<128x384xbf16, #tpu.memory_space<vmem>>, %arg5: memref<1x128xf32, #tpu.memory_space<vmem>>, %arg6: memref<1x16x64xf32, #tpu.memory_space<vmem>>, %arg7: memref<64x128xbf16, #tpu.memory_space<vmem>>, %arg8: memref<1x128xf32, #tpu.memory_space<vmem>>, %arg9: memref<1x16x128xf32, #tpu.memory_space<vmem>>) attributes {dimension_semantics = [#tpu.dimension_semantics<parallel>], iteration_bounds = array<i64: 2>, scalar_prefetch = 0 : i64, scratch_operands = 0 : i64, tpu.core_type = #tpu.core_type<tc>, window_params = [{transform_indices = @transform_0, window_bounds = array<i64: 1, 16, 128>}, {pipeline_mode = #tpu.pipeline_mode<synchronous>, transform_indices = @transform_1, window_bounds = array<i64: 1, 128>}, {pipeline_mode = #tpu.pipeline_mode<synchronous>, transform_indices = @transform_2, window_bounds = array<i64: 1, 128>}, {pipeline_mode = #tpu.pipeline_mode<synchronous>, transform_indices = @transform_3, window_bounds = array<i64: 128, 384>}, {pipeline_mode = #tpu.pipeline_mode<synchronous>, transform_indices = @transform_4, window_bounds = array<i64: 1, 128>}, {transform_indices = @transform_5, window_bounds = array<i64: 1, 16, 64>}, {pipeline_mode = #tpu.pipeline_mode<synchronous>, transform_indices = @transform_6, window_bounds = array<i64: 64, 128>}, {pipeline_mode = #tpu.pipeline_mode<synchronous>, transform_indices = @transform_7, window_bounds = array<i64: 1, 128>}, {transform_indices = @transform_8, window_bounds = array<i64: 1, 16, 128>}]} {
    %c0 = arith.constant 0 : index
    %c0_0 = arith.constant 0 : index
    %c0_1 = arith.constant 0 : index
    %0 = vector.load %arg1[%c0, %c0_0, %c0_1] : memref<1x16x128xf32, #tpu.memory_space<vmem>>, vector<1x16x128xf32>
    %1 = vector.shape_cast %0 : vector<1x16x128xf32> to vector<16x128xf32>
    %c0_2 = arith.constant 0 : index
    %c0_3 = arith.constant 0 : index
    %2 = vector.load %arg2[%c0_2, %c0_3] : memref<1x128xf32, #tpu.memory_space<vmem>>, vector<1x128xf32>
    %3 = vector.broadcast %2 : vector<1x128xf32> to vector<16x128xf32>
    %4 = arith.mulf %1, %3 : vector<16x128xf32>
    %c0_4 = arith.constant 0 : index
    %c0_5 = arith.constant 0 : index
    %5 = vector.load %arg3[%c0_4, %c0_5] : memref<1x128xf32, #tpu.memory_space<vmem>>, vector<1x128xf32>
    %6 = vector.broadcast %5 : vector<1x128xf32> to vector<16x128xf32>
    %7 = arith.addf %4, %6 : vector<16x128xf32>
    %cst = arith.constant 5.000000e-01 : f32
    %8 = vector.broadcast %cst : f32 to vector<16x128xf32>
    %9 = arith.mulf %8, %7 : vector<16x128xf32>
    %cst_6 = arith.constant 0.707106769 : f32
    %10 = vector.broadcast %cst_6 : f32 to vector<16x128xf32>
    %11 = arith.mulf %7, %10 : vector<16x128xf32>
    %12 = math.erf %11 : vector<16x128xf32>
    %cst_7 = arith.constant 1.000000e+00 : f32
    %13 = vector.broadcast %cst_7 : f32 to vector<16x128xf32>
    %14 = arith.addf %13, %12 : vector<16x128xf32>
    %15 = arith.mulf %9, %14 : vector<16x128xf32>
    %16 = arith.truncf %15 : vector<16x128xf32> to vector<16x128xbf16>
    %c0_8 = arith.constant 0 : index
    %c0_9 = arith.constant 0 : index
    %17 = vector.load %arg4[%c0_8, %c0_9] : memref<128x384xbf16, #tpu.memory_space<vmem>>, vector<128x384xbf16>
    %cst_10 = arith.constant dense<0.000000e+00> : vector<16x384xf32>
    %18 = tpu.matmul %16, %17, %cst_10 {dimension_numbers = #tpu.dot_dimension_numbers<[1], [0], [0], [1], [0, 0, 1, 1], [], []>} : vector<16x128xbf16>, vector<128x384xbf16>, vector<16x384xf32> -> vector<16x384xf32>
    %cst_11 = arith.constant 0.000000e+00 : f32
    %19 = vector.broadcast %cst_11 : f32 to vector<1x128xf32>
    %20 = vector.extract_strided_slice %18 {offsets = [0, 128], sizes = [16, 128], strides = [1, 1]} : vector<16x384xf32> to vector<16x128xf32>
    %21 = vector.extract_strided_slice %18 {offsets = [0, 0], sizes = [15, 128], strides = [1, 1]} : vector<16x384xf32> to vector<15x128xf32>
    %22 = tpu.concatenate %19, %21 in 0 : vector<1x128xf32>, vector<15x128xf32> -> vector<16x128xf32>
    %23 = arith.addf %20, %22 : vector<16x128xf32>
    %24 = vector.extract_strided_slice %18 {offsets = [1, 256], sizes = [15, 128], strides = [1, 1]} : vector<16x384xf32> to vector<15x128xf32>
    %25 = tpu.concatenate %24, %19 in 0 : vector<15x128xf32>, vector<1x128xf32> -> vector<16x128xf32>
    %26 = arith.addf %23, %25 : vector<16x128xf32>
    %c0_12 = arith.constant 0 : index
    %c0_13 = arith.constant 0 : index
    %27 = vector.load %arg5[%c0_12, %c0_13] : memref<1x128xf32, #tpu.memory_space<vmem>>, vector<1x128xf32>
    %28 = vector.broadcast %27 : vector<1x128xf32> to vector<16x128xf32>
    %29 = arith.addf %26, %28 : vector<16x128xf32>
    %c0_14 = arith.constant 0 : index
    %c0_15 = arith.constant 0 : index
    %c0_16 = arith.constant 0 : index
    %30 = vector.load %arg6[%c0_14, %c0_15, %c0_16] : memref<1x16x64xf32, #tpu.memory_space<vmem>>, vector<1x16x64xf32>
    %31 = vector.shape_cast %30 : vector<1x16x64xf32> to vector<16x64xf32>
    %32 = arith.truncf %31 : vector<16x64xf32> to vector<16x64xbf16>
    %c0_17 = arith.constant 0 : index
    %c0_18 = arith.constant 0 : index
    %33 = vector.load %arg7[%c0_17, %c0_18] : memref<64x128xbf16, #tpu.memory_space<vmem>>, vector<64x128xbf16>
    %cst_19 = arith.constant dense<0.000000e+00> : vector<16x128xf32>
    %34 = tpu.matmul %32, %33, %cst_19 {dimension_numbers = #tpu.dot_dimension_numbers<[1], [0], [0], [1], [0, 0, 1, 1], [], []>} : vector<16x64xbf16>, vector<64x128xbf16>, vector<16x128xf32> -> vector<16x128xf32>
    %c0_20 = arith.constant 0 : index
    %c0_21 = arith.constant 0 : index
    %35 = vector.load %arg8[%c0_20, %c0_21] : memref<1x128xf32, #tpu.memory_space<vmem>>, vector<1x128xf32>
    %36 = vector.broadcast %35 : vector<1x128xf32> to vector<16x128xf32>
    %37 = arith.addf %34, %36 : vector<16x128xf32>
    %38 = arith.addf %29, %37 : vector<16x128xf32>
    %c0_22 = arith.constant 0 : index
    %c0_23 = arith.constant 0 : index
    %c0_24 = arith.constant 0 : index
    %39 = vector.load %arg9[%c0_22, %c0_23, %c0_24] : memref<1x16x128xf32, #tpu.memory_space<vmem>>, vector<1x16x128xf32>
    %40 = vector.shape_cast %39 : vector<1x16x128xf32> to vector<16x128xf32>
    %41 = vector.shape_cast %38 : vector<16x128xf32> to vector<1x16x128xf32>
    tpu.vector_store %arg9[%c0_22, %c0_23, %c0_24], %41 {strides = array<i32>} : memref<1x16x128xf32, #tpu.memory_space<vmem>>, vector<1x16x128xf32>,
    return
  }
  func.func @transform_0(%arg0: i32) -> (i32, i32, i32) {
    %c0_i32 = arith.constant 0 : i32
    %c0_i32_0 = arith.constant 0 : i32
    %c0_i32_1 = arith.constant 0 : i32
    return %arg0, %c0_i32, %c0_i32_0 : i32, i32, i32
  }
  func.func @transform_1(%arg0: i32) -> (i32, i32) {
    %c0_i32 = arith.constant 0 : i32
    %c0_i32_0 = arith.constant 0 : i32
    %c0_i32_1 = arith.constant 0 : i32
    return %c0_i32, %c0_i32_0 : i32, i32
  }
  func.func @transform_2(%arg0: i32) -> (i32, i32) {
    %c0_i32 = arith.constant 0 : i32
    %c0_i32_0 = arith.constant 0 : i32
    %c0_i32_1 = arith.constant 0 : i32
    return %c0_i32, %c0_i32_0 : i32, i32
  }
  func.func @transform_3(%arg0: i32) -> (i32, i32) {
    %c0_i32 = arith.constant 0 : i32
    %c0_i32_0 = arith.constant 0 : i32
    %c0_i32_1 = arith.constant 0 : i32
    return %c0_i32, %c0_i32_0 : i32, i32
  }
  func.func @transform_4(%arg0: i32) -> (i32, i32) {
    %c0_i32 = arith.constant 0 : i32
    %c0_i32_0 = arith.constant 0 : i32
    %c0_i32_1 = arith.constant 0 : i32
    return %c0_i32, %c0_i32_0 : i32, i32
  }
  func.func @transform_5(%arg0: i32) -> (i32, i32, i32) {
    %c0_i32 = arith.constant 0 : i32
    %c0_i32_0 = arith.constant 0 : i32
    %c0_i32_1 = arith.constant 0 : i32
    return %arg0, %c0_i32, %c0_i32_0 : i32, i32, i32
  }
  func.func @transform_6(%arg0: i32) -> (i32, i32) {
    %c0_i32 = arith.constant 0 : i32
    %c0_i32_0 = arith.constant 0 : i32
    %c0_i32_1 = arith.constant 0 : i32
    return %c0_i32, %c0_i32_0 : i32, i32
  }
  func.func @transform_7(%arg0: i32) -> (i32, i32) {
    %c0_i32 = arith.constant 0 : i32
    %c0_i32_0 = arith.constant 0 : i32
    %c0_i32_1 = arith.constant 0 : i32
    return %c0_i32, %c0_i32_0 : i32, i32
  }
  func.func @transform_8(%arg0: i32) -> (i32, i32, i32) {
    %c0_i32 = arith.constant 0 : i32
    %c0_i32_0 = arith.constant 0 : i32
    %c0_i32_1 = arith.constant 0 : i32
    return %arg0, %c0_i32, %c0_i32_0 : i32, i32, i32
  }
}

</mosaic_0001>

<llo_original>
// kernel: forward.2
$region0: #{forward.2}
  #allocation0 [shape = 'u32[]', space=smem, size = 0x4, offset = 0x4, fixed_abs, tag = 'smem constant byte address 0x4 - core index']
  #allocation1 [shape = 'u32[72,128]{1,0:T(1,128)}', space=vmem, size = 0x9000, scoped, tag = 'internal scratch']
  %s0 = inlined_call_operand.vmem [shape: f32[2,16,64], index: 0, kind: input, shape index: {}]
  %s1 = inlined_call_operand.vmem [shape: bf16[64,384], index: 1, kind: input, shape index: {}]
  %s2 = inlined_call_operand.vmem [shape: f32[128,8], index: 2, kind: input, shape index: {}]
  %s3 = inlined_call_operand.vmem [shape: f32[2,16,128], index: 3, kind: output, shape index: {0}]
  %s4 = inlined_call_operand.vmem [shape: f32[2,8], index: 4, kind: output, shape index: {1}]
  %5 = xla_tuple %s3, %s4
  %s6 = sld [smem:[#allocation0]]
  $region57: #{forward.2} parent=0
    _
  %s8 = ssub.s32 1, %s6
  %s9 = scalar_select 0, %s8, %s6
  loop: start=0, step=1, limit=4
  $region2: #{forward.2} parent=0 // loop_pre_header
    _
  $region3: #{forward.2} parent=0 // loop_header
    %s11 = sphi 0, %s15
    %p12 = scmp.ge.s32.totalorder %s11, 4
    %s21 = sphi 0, %s23
    %s24 = sphi 0, %s21
    %s25 = sphi 0, %s24
    %s41 = sphi 0, %s25
    %s45 = sphi 0, %s45
    %s47 = sphi 0, %s45
    %s48 = sphi 0, %s47
    %s62 = sphi 0, %s48
    %s66 = sphi 0, %s66
    %s68 = sphi 0, %s66
    %s69 = sphi 0, %s68
    %s83 = sphi 0, %s69
    %s89 = sphi 0, %s91
    %s92 = sphi 0, %s89
    %s93 = sphi 0, %s92
    %s109 = sphi 0, %s93
    %s113 = sphi 0, %s113
    %s115 = sphi 0, %s113
    %s116 = sphi 0, %s115
    %s130 = sphi 0, %s116
  $region4: #{forward.2} parent=0 // loop_header_branch
    %14 = sbr.rel (%p12) target = $region8
  $region5: #{forward.2} parent=0 // loop_body
    %s16 = ssub.s32 %s11, 1
    %s17 = ssub.s32 %s11, 2
    %s18 = sadd.s32 %s11, 1
    %s19 = ssub.s32 %s11, %s18
    %p20 = scmp.eq.s32.totalorder %s19, 0
    %s22 = sadd.s32 %s21, 1
    %s23 = scalar_select %p20, %s21, %s22
    %p26 = pneg %p20
    %p27 = scmp.eq.s32.totalorder %s11, 1
    %p28 = por %p26, %p27
    %p29 = scmp.ne.s32.totalorder %s21, %s24
    %p30 = scmp.eq.s32.totalorder %s11, 0
    %p31 = por %p29, %p30
    %p32 = scmp.ne.s32.totalorder %s21, %s24
    %p33 = scmp.eq.s32.totalorder %s16, 1
    %p34 = por %p32, %p33
    %p35 = scmp.ne.s32.totalorder %s24, %s25
    %p36 = scmp.eq.s32.totalorder %s16, 0
    %p37 = por %p35, %p36
    %p38 = scmp.ne.s32.totalorder %s24, %s25
    %p39 = scmp.eq.s32.totalorder %s17, 1
    %p40 = por %p38, %p39
    %p42 = scmp.ne.s32.totalorder %s25, %s41
    %p43 = scmp.eq.s32.totalorder %s17, 0
    %p44 = por %p42, %p43
    %s46 = sadd.s32 %s45, 1
    %p49 = scmp.eq.s32.totalorder %s11, 1
    %p50 = scmp.ne.s32.totalorder %s45, %s47
    %p51 = scmp.eq.s32.totalorder %s11, 0
    %p52 = por %p50, %p51
    %p53 = scmp.ne.s32.totalorder %s45, %s47
    %p54 = scmp.eq.s32.totalorder %s16, 1
    %p55 = por %p53, %p54
    %p56 = scmp.ne.s32.totalorder %s47, %s48
    %p57 = scmp.eq.s32.totalorder %s16, 0
    %p58 = por %p56, %p57
    %p59 = scmp.ne.s32.totalorder %s47, %s48
    %p60 = scmp.eq.s32.totalorder %s17, 1
    %p61 = por %p59, %p60
    %p63 = scmp.ne.s32.totalorder %s48, %s62
    %p64 = scmp.eq.s32.totalorder %s17, 0
    %p65 = por %p63, %p64
    %s67 = sadd.s32 %s66, 1
    %p70 = scmp.eq.s32.totalorder %s11, 1
    %p71 = scmp.ne.s32.totalorder %s66, %s68
    %p72 = scmp.eq.s32.totalorder %s11, 0
    %p73 = por %p71, %p72
    %p74 = scmp.ne.s32.totalorder %s66, %s68
    %p75 = scmp.eq.s32.totalorder %s16, 1
    %p76 = por %p74, %p75
    %p77 = scmp.ne.s32.totalorder %s68, %s69
    %p78 = scmp.eq.s32.totalorder %s16, 0
    %p79 = por %p77, %p78
    %p80 = scmp.ne.s32.totalorder %s68, %s69
    %p81 = scmp.eq.s32.totalorder %s17, 1
    %p82 = por %p80, %p81
    %p84 = scmp.ne.s32.totalorder %s69, %s83
    %p85 = scmp.eq.s32.totalorder %s17, 0
    %p86 = por %p84, %p85
    %s87 = ssub.s32 %s11, %s18
    %p88 = scmp.eq.s32.totalorder %s87, 0
    %s90 = sadd.s32 %s89, 1
    %s91 = scalar_select %p88, %s89, %s90
    %p94 = pneg %p88
    %p95 = scmp.eq.s32.totalorder %s11, 1
    %p96 = por %p94, %p95
    %p97 = scmp.ne.s32.totalorder %s89, %s92
    %p98 = scmp.eq.s32.totalorder %s11, 0
    %p99 = por %p97, %p98
    %p100 = scmp.ne.s32.totalorder %s89, %s92
    %p101 = scmp.eq.s32.totalorder %s16, 1
    %p102 = por %p100, %p101
    %p103 = scmp.ne.s32.totalorder %s92, %s93
    %p104 = scmp.eq.s32.totalorder %s16, 0
    %p105 = por %p103, %p104
    %p106 = scmp.ne.s32.totalorder %s92, %s93
    %p107 = scmp.eq.s32.totalorder %s17, 1
    %p108 = por %p106, %p107
    %p110 = scmp.ne.s32.totalorder %s93, %s109
    %p111 = scmp.eq.s32.totalorder %s17, 0
    %p112 = por %p110, %p111
    %s114 = sadd.s32 %s113, 1
    %p117 = scmp.eq.s32.totalorder %s11, 1
    %p118 = scmp.ne.s32.totalorder %s113, %s115
    %p119 = scmp.eq.s32.totalorder %s11, 0
    %p120 = por %p118, %p119
    %p121 = scmp.ne.s32.totalorder %s113, %s115
    %p122 = scmp.eq.s32.totalorder %s16, 1
    %p123 = por %p121, %p122
    %p124 = scmp.ne.s32.totalorder %s115, %s116
    %p125 = scmp.eq.s32.totalorder %s16, 0
    %p126 = por %p124, %p125
    %p127 = scmp.ne.s32.totalorder %s115, %s116
    %p128 = scmp.eq.s32.totalorder %s17, 1
    %p129 = por %p127, %p128
    %p131 = scmp.ne.s32.totalorder %s116, %s130
    %p132 = scmp.eq.s32.totalorder %s17, 0
    %p133 = por %p131, %p132
    %p134 = scmp.le.s32.totalorder 1, %s11
    %p135 = scmp.lt.s32.totalorder %s11, 3
    %p136 = pnand %p134, %p135
    %p137 = pneg %p136
    // Predicated region
    $region9: #{forward.2} parent=5 // pred_check
      _
    $region10: #{forward.2} parent=5 // pred_check_branch
      %139 = sbr.rel (%p136) target = $region12
    $region11: #{forward.2} parent=5 // pred_region
      %s140 = ssub.s32 %s11, 1
      // Predicated region
      $region13: #{forward.2} parent=11 // pred_check
        %p141 = pneg %p58
      $region14: #{forward.2} parent=11 // pred_check_branch
        %143 = sbr.rel (%p141) target = $region16
      $region15: #{forward.2} parent=11 // pred_region
        _
      $region16: #{forward.2} parent=11 // pred_fallthru
        _
      // Predicated region
      $region17: #{forward.2} parent=11 // pred_check
        %p144 = pneg %p79
      $region18: #{forward.2} parent=11 // pred_check_branch
        %146 = sbr.rel (%p144) target = $region20
      $region19: #{forward.2} parent=11 // pred_region
        _
      $region20: #{forward.2} parent=11 // pred_fallthru
        _
    $region12: #{forward.2} parent=5 // pred_fallthru
      _
    %p147 = scmp.lt.s32.totalorder %s11, 2
    // Predicated region
    $region21: #{forward.2} parent=5 // pred_check
      %p148 = pneg %p147
    $region22: #{forward.2} parent=5 // pred_check_branch
      %150 = sbr.rel (%p148) target = $region24
    $region23: #{forward.2} parent=5 // pred_region
      // Predicated region
      $region25: #{forward.2} parent=23 // pred_check
        %p151 = pneg %p31
      $region26: #{forward.2} parent=23 // pred_check_branch
        %153 = sbr.rel (%p151) target = $region28
      $region27: #{forward.2} parent=23 // pred_region
        %p154 = scmp.lt.s32.totalorder %s11, 1
        %s155 = scalar_select %p154, %s11, 1
        %s156 = smul.addr %s155, 2
        %s157 = smul.addr %s156, 8
        %s158 = scalar_lea.vmem %s0, %s157
      $region28: #{forward.2} parent=23 // pred_fallthru
        _
    $region24: #{forward.2} parent=5 // pred_fallthru
      _
    %p159 = scmp.le.s32.totalorder 1, %s11
    %p160 = scmp.lt.s32.totalorder %s11, 3
    %p161 = pnand %p159, %p160
    %p162 = pneg %p161
    // Predicated region
    $region29: #{forward.2} parent=5 // pred_check
      _
    $region30: #{forward.2} parent=5 // pred_check_branch
      %164 = sbr.rel (%p161) target = $region32
    $region31: #{forward.2} parent=5 // pred_region
      %s165 = ssub.s32 %s11, 1
      %p166 = scmp.lt.s32.totalorder %s16, 1
      %s167 = scalar_select %p166, %s16, 1
      %s168 = smul.addr %s167, 2
      %s169 = smul.addr %s168, 8
      %s170 = scalar_lea.vmem %s0, %s169
      %p171 = pneg %p37
      %p172 = pneg %p34
      %p173 = pneg %p58
      %p174 = pneg %p55
      %p175 = pneg %p79
      %p176 = pneg %p76
      %p177 = pneg %p105
      %p178 = pneg %p102
      %p179 = scmp.lt.s32.totalorder %s16, 1
      %s180 = scalar_select %p179, %s16, 1
      %s181 = smul.addr %s180, 2
      %s182 = smul.addr %s181, 8
      %s183 = scalar_lea.vmem %s3, %s182
      %p184 = pneg %p126
      %p185 = pneg %p123
      %p186 = scmp.lt.s32.totalorder %s16, 1
      %s187 = scalar_select %p186, %s16, 1
      %s188 = smul.addr %s187, 2
      %s189 = smul.addr %s188, 8
      %s190 = scalar_lea.vmem %s0, %s189
      %p191 = scmp.lt.s32.totalorder %s16, 1
      %s192 = scalar_select %p191, %s16, 1
      %s193 = smul.addr %s192, 2
      %s194 = smul.addr %s193, 8
      %s195 = scalar_lea.vmem %s3, %s194
      %v197 = vld [vmem:[%s190] sm:$0xff]
      %v198 = vld [vmem:[%s190 + $0x8] sm:$0xff]
      %v199 = vmul.f32 %v197, 0.5
      %v200 = vmul.f32 %v198, 0.5
      %v201 = vmul.f32 %v197, 0.70710677
      %v202 = vmul.f32 %v198, 0.70710677
      %v203 = vmul.f32 %v201, %v201
      %v204 = vmin.f32 16.0, %v203
      %v205 = vmul.f32 %v204, 2.1237322e-06
      %v206 = vadd.f32 %v205, 0.00028619796
      %v207 = vmul.f32 %v204, %v206
      %v208 = vadd.f32 %v207, 0.0036580483
      %v209 = vmul.f32 %v204, %v208
      %v210 = vadd.f32 %v209, 0.05243302
      %v211 = vmul.f32 %v204, %v210
      %v212 = vadd.f32 %v211, 0.18741608
      %v213 = vmul.f32 %v204, %v212
      %v214 = vadd.f32 %v213, 1.1283791
      %v215 = vmul.f32 %v201, %v214
      %v216 = vmul.f32 %v204, 3.8918573e-05
      %v217 = vadd.f32 %v216, 0.001143296
      %v218 = vmul.f32 %v204, %v217
      %v219 = vadd.f32 %v218, 0.014752088
      %v220 = vmul.f32 %v204, %v219
      %v221 = vadd.f32 %v220, 0.112945676
      %v222 = vmul.f32 %v204, %v221
      %v223 = vadd.f32 %v222, 0.4994258
      %v224 = vmul.f32 %v204, %v223
      %v225 = vadd.f32 %v224, 1.0
      %v226 = vrcp.pop %v225
      %v227 = vmul.f32 %v225, %v226
      %v228 = vsub.f32 1.0, %v227
      %v229 = vmul.f32 %v226, %v228
      %v230 = vadd.f32 %v226, %v229
      %vm231 = vweird.f32 %v225
      %vm232 = vweird.f32 %v226
      %vm233 = vmor %vm231, %vm232
      %v234 = vsel %vm233, %v226, %v230
      %v235 = vand.u32 2147483647, %v225
      %vm236 = vcmp.eq.f32.partialorder %v235, 8.507059e+37
      %v237 = vand.u32 %v225, 2147483648
      %v238 = vor.u32 1.1754944e-38, %v237
      %v239 = vsel %vm236, %v238, %v234
      %v240 = vmul.f32 %v215, %v239
      %v241 = vmin.f32 %v240, 1.0
      %v242 = vmax.f32 %v241, -1.0
      %v243 = vmul.f32 %v202, %v202
      %v244 = vmin.f32 16.0, %v243
      %v245 = vmul.f32 %v244, 2.1237322e-06
      %v246 = vadd.f32 %v245, 0.00028619796
      %v247 = vmul.f32 %v244, %v246
      %v248 = vadd.f32 %v247, 0.0036580483
      %v249 = vmul.f32 %v244, %v248
      %v250 = vadd.f32 %v249, 0.05243302
      %v251 = vmul.f32 %v244, %v250
      %v252 = vadd.f32 %v251, 0.18741608
      %v253 = vmul.f32 %v244, %v252
      %v254 = vadd.f32 %v253, 1.1283791
      %v255 = vmul.f32 %v202, %v254
      %v256 = vmul.f32 %v244, 3.8918573e-05
      %v257 = vadd.f32 %v256, 0.001143296
      %v258 = vmul.f32 %v244, %v257
      %v259 = vadd.f32 %v258, 0.014752088
      %v260 = vmul.f32 %v244, %v259
      %v261 = vadd.f32 %v260, 0.112945676
      %v262 = vmul.f32 %v244, %v261
      %v263 = vadd.f32 %v262, 0.4994258
      %v264 = vmul.f32 %v244, %v263
      %v265 = vadd.f32 %v264, 1.0
      %v266 = vrcp.pop %v265
      %v267 = vmul.f32 %v265, %v266
      %v268 = vsub.f32 1.0, %v267
      %v269 = vmul.f32 %v266, %v268
      %v270 = vadd.f32 %v266, %v269
      %vm271 = vweird.f32 %v265
      %vm272 = vweird.f32 %v266
      %vm273 = vmor %vm271, %vm272
      %v274 = vsel %vm273, %v266, %v270
      %v275 = vand.u32 2147483647, %v265
      %vm276 = vcmp.eq.f32.partialorder %v275, 8.507059e+37
      %v277 = vand.u32 %v265, 2147483648
      %v278 = vor.u32 1.1754944e-38, %v277
      %v279 = vsel %vm276, %v278, %v274
      %v280 = vmul.f32 %v255, %v279
      %v281 = vmin.f32 %v280, 1.0
      %v282 = vmax.f32 %v281, -1.0
      %v283 = vadd.f32 %v242, 1.0
      %v284 = vadd.f32 %v282, 1.0
      %v285 = vmul.f32 %v199, %v283
      %v286 = vmul.f32 %v200, %v284
      %v287 = vpack.c.bf16 %v286, %v285
      %v288 = vld [vmem:[%s1] sm:$0xff]
      %v289 = vld [vmem:[%s1 + $0x8] sm:$0xf]
      %v290 = vld [vmem:[%s1 + $0xc] sm:$0xff]
      %v291 = vld [vmem:[%s1 + $0x14] sm:$0xf]
      %v292 = vld [vmem:[%s1 + $0x18] sm:$0xff]
      %v293 = vld [vmem:[%s1 + $0x20] sm:$0xf]
      %v294 = vld [vmem:[%s1 + $0x24] sm:$0xff]
      %v295 = vld [vmem:[%s1 + $0x2c] sm:$0xf]
      %v296 = vld [vmem:[%s1 + $0x30] sm:$0xff]
      %v297 = vld [vmem:[%s1 + $0x38] sm:$0xf]
      %v298 = vld [vmem:[%s1 + $0x3c] sm:$0xff]
      %v299 = vld [vmem:[%s1 + $0x44] sm:$0xf]
      %v300 = vld [vmem:[%s1 + $0x48] sm:$0xff]
      %v301 = vld [vmem:[%s1 + $0x50] sm:$0xf]
      %v302 = vld [vmem:[%s1 + $0x54] sm:$0xff]
      %v303 = vld [vmem:[%s1 + $0x5c] sm:$0xf]
      %v320 = vunpack.c.l.b16 %v288
      %v321 = vunpack.c.h.b16 %v288
      %v322 = vunpack.c.l.b16 %v289
      %v323 = vunpack.c.l.b16 %v290
      %v324 = vunpack.c.h.b16 %v290
      %v325 = vunpack.c.l.b16 %v291
      %v326 = vunpack.c.l.b16 %v292
      %v327 = vunpack.c.h.b16 %v292
      %v328 = vunpack.c.l.b16 %v293
      %v329 = vunpack.c.l.b16 %v294
      %v330 = vunpack.c.h.b16 %v294
      %v331 = vunpack.c.l.b16 %v295
      %v332 = vunpack.c.l.b16 %v296
      %v333 = vunpack.c.h.b16 %v296
      %v334 = vunpack.c.l.b16 %v297
      %v335 = vunpack.c.l.b16 %v298
      %v336 = vunpack.c.h.b16 %v298
      %v337 = vunpack.c.l.b16 %v299
      %v338 = vunpack.c.l.b16 %v300
      %v339 = vunpack.c.h.b16 %v300
      %v340 = vunpack.c.l.b16 %v301
      %v341 = vunpack.c.l.b16 %v302
      %v342 = vunpack.c.h.b16 %v302
      %v343 = vunpack.c.l.b16 %v303
      %v344 = vpack.c.b16 %v323, %v320
      %v345 = vpack.c.b16 %v324, %v321
      %v346 = vpack.c.b16 %v325, %v322
      %v347 = vpack.c.b16 %v329, %v326
      %v348 = vpack.c.b16 %v330, %v327
      %v349 = vpack.c.b16 %v331, %v328
      %v350 = vpack.c.b16 %v335, %v332
      %v351 = vpack.c.b16 %v336, %v333
      %v352 = vpack.c.b16 %v337, %v334
      %v353 = vpack.c.b16 %v341, %v338
      %v354 = vpack.c.b16 %v342, %v339
      %v355 = vpack.c.b16 %v343, %v340
      %vm368 = vcmask 523264
      %v370 = vsel %vm368, %v287, 0
      %372 = vmatpush.bf16.msra.mxu0 0
      %373 = vmatpush.bf16.msra.mxu0 0
      %374 = vmatpush.bf16.msra.mxu0 0
      %375 = vmatpush.bf16.msra.mxu0 0
      %376 = vmatpush.bf16.msra.mxu0 %v353
      %377 = vmatpush.bf16.msra.mxu0 %v350
      %378 = vmatpush.bf16.msra.mxu0 %v347
      %379 = vmatpush.bf16.msra.mxu0 %v344
      %380 = vmatmul.bf16.gmra.mxu0 %v370
      %v381 = vpop.f32.mrf.mxu0
      %v382 = vadd.f32 0.0, %v381
      %v383 = vpop.f32.mrf.mxu0
      %v384 = vadd.f32 0.0, %v383
      %385 = vdwg.mxu0
      %386 = vmatpush.bf16.msra.mxu0 0
      %387 = vmatpush.bf16.msra.mxu0 0
      %388 = vmatpush.bf16.msra.mxu0 0
      %389 = vmatpush.bf16.msra.mxu0 0
      %390 = vmatpush.bf16.msra.mxu0 %v354
      %391 = vmatpush.bf16.msra.mxu0 %v351
      %392 = vmatpush.bf16.msra.mxu0 %v348
      %393 = vmatpush.bf16.msra.mxu0 %v345
      %394 = vmatmul.bf16.gmra.mxu0 %v370
      %v395 = vpop.f32.mrf.mxu0
      %v396 = vadd.f32 0.0, %v395
      %v397 = vpop.f32.mrf.mxu0
      %v398 = vadd.f32 0.0, %v397
      %399 = vdwg.mxu0
      %400 = vmatpush.bf16.msra.mxu0 0
      %401 = vmatpush.bf16.msra.mxu0 0
      %402 = vmatpush.bf16.msra.mxu0 0
      %403 = vmatpush.bf16.msra.mxu0 0
      %404 = vmatpush.bf16.msra.mxu0 %v355
      %405 = vmatpush.bf16.msra.mxu0 %v352
      %406 = vmatpush.bf16.msra.mxu0 %v349
      %407 = vmatpush.bf16.msra.mxu0 %v346
      %408 = vmatmul.bf16.gmra.mxu0 %v370
      %v409 = vpop.f32.mrf.mxu0
      %v410 = vadd.f32 0.0, %v409
      %v411 = vpop.f32.mrf.mxu0
      %v412 = vadd.f32 0.0, %v411
      %413 = vdwg.mxu0
      %vm416 = vcmask 1040384
      %v417 = vrot.slane %v382, 7
      %v418 = vrot.slane %v384, 7
      %v419 = vsel %vm416, %v417, %v418
      %v422 = vsel %vm416, 0.0, %v417
      %v423 = vadd.f32 %v396, %v422
      %v424 = vadd.f32 %v398, %v419
      %vm427 = vcmask 1046528
      %v428 = vrot.slane %v410, 1
      %v429 = vrot.slane %v412, 1
      %v430 = vsel %vm427, %v428, %v429
      %v433 = vsel %vm427, %v429, 0.0
      %v434 = vadd.f32 %v423, %v430
      %v435 = vadd.f32 %v424, %v433
      %436 = vst [vmem:[%s195] sm:$0xff] %v434
      %437 = vst [vmem:[%s195 + $0x8] sm:$0xff] %v435
      %v438 = vadd.f32 %v434, %v435
      %v439 = vrot.slane %v438, 4
      %v440 = vadd.f32 %v438, %v439
      %v441 = vrot.slane %v440, 2
      %v442 = vadd.f32 %v440, %v441
      %v443 = vrot.slane %v442, 1
      %v444 = vadd.f32 %v442, %v443
      %v445 = vmul.f32 %v434, %v434
      %v446 = vmul.f32 %v435, %v435
      %v447 = vadd.f32 %v445, %v446
      %v448 = vrot.slane %v447, 4
      %v449 = vadd.f32 %v447, %v448
      %v450 = vrot.slane %v449, 2
      %v451 = vadd.f32 %v449, %v450
      %v452 = vrot.slane %v451, 1
      %v453 = vadd.f32 %v451, %v452
      %v454 = vsel %vm416, %v444, %v453
      %v455 = vld [vmem:[%s2] sm:$0xff]
      %v456 = vld [vmem:[%s2 + $0x8] sm:$0xff]
      %v457 = vld [vmem:[%s2 + $0x10] sm:$0xff]
      %v458 = vld [vmem:[%s2 + $0x18] sm:$0xff]
      %v459 = vld [vmem:[%s2 + $0x20] sm:$0xff]
      %v460 = vld [vmem:[%s2 + $0x28] sm:$0xff]
      %v461 = vld [vmem:[%s2 + $0x30] sm:$0xff]
      %v462 = vld [vmem:[%s2 + $0x38] sm:$0xff]
      %v463 = vld [vmem:[%s2 + $0x40] sm:$0xff]
      %v464 = vld [vmem:[%s2 + $0x48] sm:$0xff]
      %v465 = vld [vmem:[%s2 + $0x50] sm:$0xff]
      %v466 = vld [vmem:[%s2 + $0x58] sm:$0xff]
      %v467 = vld [vmem:[%s2 + $0x60] sm:$0xff]
      %v468 = vld [vmem:[%s2 + $0x68] sm:$0xff]
      %v469 = vld [vmem:[%s2 + $0x70] sm:$0xff]
      %v470 = vld [vmem:[%s2 + $0x78] sm:$0xff]
      %471 = vmatpush.msra.mxu0 %v470
      %472 = vmatpush.msra.mxu0 %v469
      %473 = vmatpush.msra.mxu0 %v468
      %474 = vmatpush.msra.mxu0 %v467
      %475 = vmatpush.msra.mxu0 %v466
      %476 = vmatpush.msra.mxu0 %v465
      %477 = vmatpush.msra.mxu0 %v464
      %478 = vmatpush.msra.mxu0 %v463
      %479 = vmatpush.msra.mxu0 %v462
      %480 = vmatpush.msra.mxu0 %v461
      %481 = vmatpush.msra.mxu0 %v460
      %482 = vmatpush.msra.mxu0 %v459
      %483 = vmatpush.msra.mxu0 %v458
      %484 = vmatpush.msra.mxu0 %v457
      %485 = vmatpush.msra.mxu0 %v456
      %486 = vmatpush.msra.mxu0 %v455
      %487 = vmatmul.f32.gmra.mxu0 %v454
      %v488 = vpop.f32.mrf.mxu0
      %v489 = vadd.f32 0.0, %v488
      %490 = vdwg.mxu0
      %p491 = scmp.eq.s32.totalorder %s16, 0
      // Predicated region
      $region33: #{forward.2} parent=31 // pred_check
        %p492 = pneg %p491
      $region34: #{forward.2} parent=31 // pred_check_branch
        %494 = sbr.rel (%p492) target = $region36
      $region35: #{forward.2} parent=31 // pred_region
        %vm495 = vcmask 58368
        %496 = vst.msk [vmem:[%s4] sm:$0x3] %vm495, 0.0
      $region36: #{forward.2} parent=31 // pred_fallthru
        _
      %v497 = vld [vmem:[%s4] sm:$0x3]
      %v498 = vadd.f32 %v497, %v489
      %vm499 = vcmask 58368
      %500 = vst.msk [vmem:[%s4] sm:$0x3] %vm499, %v498
      %p501 = scmp.lt.s32.totalorder %s16, 1
      %s502 = scalar_select %p501, %s16, 1
      %s503 = smul.addr %s502, 2
      %s504 = smul.addr %s503, 8
      %s505 = scalar_lea.vmem %s3, %s504
      // Predicated region
      $region37: #{forward.2} parent=31 // pred_check
        %p506 = pneg %p102
      $region38: #{forward.2} parent=31 // pred_check_branch
        %508 = sbr.rel (%p506) target = $region40
      $region39: #{forward.2} parent=31 // pred_region
        _
      $region40: #{forward.2} parent=31 // pred_fallthru
        _
      // Predicated region
      $region41: #{forward.2} parent=31 // pred_check
        %p509 = pneg %p123
      $region42: #{forward.2} parent=31 // pred_check_branch
        %511 = sbr.rel (%p509) target = $region44
      $region43: #{forward.2} parent=31 // pred_region
        _
      $region44: #{forward.2} parent=31 // pred_fallthru
        _
      // Predicated region
      $region45: #{forward.2} parent=31 // pred_check
        %p512 = pneg %p123
      $region46: #{forward.2} parent=31 // pred_check_branch
        %514 = sbr.rel (%p512) target = $region48
      $region47: #{forward.2} parent=31 // pred_region
        _
      $region48: #{forward.2} parent=31 // pred_fallthru
        _
    $region32: #{forward.2} parent=5 // pred_fallthru
      _
    %p515 = scmp.le.s32.totalorder 2, %s11
    // Predicated region
    $region49: #{forward.2} parent=5 // pred_check
      %p516 = pneg %p515
    $region50: #{forward.2} parent=5 // pred_check_branch
      %518 = sbr.rel (%p516) target = $region52
    $region51: #{forward.2} parent=5 // pred_region
      %s519 = ssub.s32 %s11, 2
      // Predicated region
      $region53: #{forward.2} parent=51 // pred_check
        %p520 = pneg %p108
      $region54: #{forward.2} parent=51 // pred_check_branch
        %522 = sbr.rel (%p520) target = $region56
      $region55: #{forward.2} parent=51 // pred_region
        %p523 = scmp.lt.s32.totalorder %s17, 1
        %s524 = scalar_select %p523, %s17, 1
        %s525 = smul.addr %s524, 2
        %s526 = smul.addr %s525, 8
        %s527 = scalar_lea.vmem %s3, %s526
      $region56: #{forward.2} parent=51 // pred_fallthru
        _
    $region52: #{forward.2} parent=5 // pred_fallthru
      _
  $region6: #{forward.2} parent=0 // loop_footer
    %s15 = sadd.s32 1, %s11
  $region7: #{forward.2} parent=0 // loop_footer_branch
    %10 = sbr.rel target = $region3
  $region8: #{forward.2} parent=0 // loop_exit
    _

// kernel: forward.3
$region0: #{forward.3}
  #allocation0 [shape = 'u32[]', space=smem, size = 0x4, offset = 0x4, fixed_abs, tag = 'smem constant byte address 0x4 - core index']
  #allocation1 [shape = 'u32[72,128]{1,0:T(1,128)}', space=vmem, size = 0x9000, scoped, tag = 'internal scratch']
  %s0 = inlined_call_operand.vmem [shape: f32[2,16,128], index: 0, kind: input, shape index: {}]
  %s1 = inlined_call_operand.vmem [shape: f32[1,128], index: 1, kind: input, shape index: {}]
  %s2 = inlined_call_operand.vmem [shape: f32[1,128], index: 2, kind: input, shape index: {}]
  %s3 = inlined_call_operand.vmem [shape: bf16[128,384], index: 3, kind: input, shape index: {}]
  %s4 = inlined_call_operand.vmem [shape: f32[1,128], index: 4, kind: input, shape index: {}]
  %s5 = inlined_call_operand.vmem [shape: f32[2,16,64], index: 5, kind: input, shape index: {}]
  %s6 = inlined_call_operand.vmem [shape: bf16[64,128], index: 6, kind: input, shape index: {}]
  %s7 = inlined_call_operand.vmem [shape: f32[1,128], index: 7, kind: input, shape index: {}]
  %s8 = inlined_call_operand.vmem [shape: f32[2,16,128], index: 8, kind: output, shape index: {}]
  %s9 = sld [smem:[#allocation0]]
  $region65: #{forward.3} parent=0
    _
  %s11 = ssub.s32 1, %s9
  %s12 = scalar_select 0, %s11, %s9
  loop: start=0, step=1, limit=4
  $region2: #{forward.3} parent=0 // loop_pre_header
    _
  $region3: #{forward.3} parent=0 // loop_header
    %s14 = sphi 0, %s18
    %p15 = scmp.ge.s32.totalorder %s14, 4
    %s24 = sphi 0, %s26
    %s27 = sphi 0, %s24
    %s28 = sphi 0, %s27
    %s44 = sphi 0, %s28
    %s48 = sphi 0, %s48
    %s50 = sphi 0, %s48
    %s51 = sphi 0, %s50
    %s65 = sphi 0, %s51
    %s69 = sphi 0, %s69
    %s71 = sphi 0, %s69
    %s72 = sphi 0, %s71
    %s86 = sphi 0, %s72
    %s90 = sphi 0, %s90
    %s92 = sphi 0, %s90
    %s93 = sphi 0, %s92
    %s107 = sphi 0, %s93
    %s111 = sphi 0, %s111
    %s113 = sphi 0, %s111
    %s114 = sphi 0, %s113
    %s128 = sphi 0, %s114
    %s134 = sphi 0, %s136
    %s137 = sphi 0, %s134
    %s138 = sphi 0, %s137
    %s154 = sphi 0, %s138
    %s158 = sphi 0, %s158
    %s160 = sphi 0, %s158
    %s161 = sphi 0, %s160
    %s175 = sphi 0, %s161
    %s179 = sphi 0, %s179
    %s181 = sphi 0, %s179
    %s182 = sphi 0, %s181
    %s196 = sphi 0, %s182
    %s202 = sphi 0, %s204
    %s205 = sphi 0, %s202
    %s206 = sphi 0, %s205
    %s222 = sphi 0, %s206
  $region4: #{forward.3} parent=0 // loop_header_branch
    %17 = sbr.rel (%p15) target = $region8
  $region5: #{forward.3} parent=0 // loop_body
    %s19 = ssub.s32 %s14, 1
    %s20 = ssub.s32 %s14, 2
    %s21 = sadd.s32 %s14, 1
    %s22 = ssub.s32 %s14, %s21
    %p23 = scmp.eq.s32.totalorder %s22, 0
    %s25 = sadd.s32 %s24, 1
    %s26 = scalar_select %p23, %s24, %s25
    %p29 = pneg %p23
    %p30 = scmp.eq.s32.totalorder %s14, 1
    %p31 = por %p29, %p30
    %p32 = scmp.ne.s32.totalorder %s24, %s27
    %p33 = scmp.eq.s32.totalorder %s14, 0
    %p34 = por %p32, %p33
    %p35 = scmp.ne.s32.totalorder %s24, %s27
    %p36 = scmp.eq.s32.totalorder %s19, 1
    %p37 = por %p35, %p36
    %p38 = scmp.ne.s32.totalorder %s27, %s28
    %p39 = scmp.eq.s32.totalorder %s19, 0
    %p40 = por %p38, %p39
    %p41 = scmp.ne.s32.totalorder %s27, %s28
    %p42 = scmp.eq.s32.totalorder %s20, 1
    %p43 = por %p41, %p42
    %p45 = scmp.ne.s32.totalorder %s28, %s44
    %p46 = scmp.eq.s32.totalorder %s20, 0
    %p47 = por %p45, %p46
    %s49 = sadd.s32 %s48, 1
    %p52 = scmp.eq.s32.totalorder %s14, 1
    %p53 = scmp.ne.s32.totalorder %s48, %s50
    %p54 = scmp.eq.s32.totalorder %s14, 0
    %p55 = por %p53, %p54
    %p56 = scmp.ne.s32.totalorder %s48, %s50
    %p57 = scmp.eq.s32.totalorder %s19, 1
    %p58 = por %p56, %p57
    %p59 = scmp.ne.s32.totalorder %s50, %s51
    %p60 = scmp.eq.s32.totalorder %s19, 0
    %p61 = por %p59, %p60
    %p62 = scmp.ne.s32.totalorder %s50, %s51
    %p63 = scmp.eq.s32.totalorder %s20, 1
    %p64 = por %p62, %p63
    %p66 = scmp.ne.s32.totalorder %s51, %s65
    %p67 = scmp.eq.s32.totalorder %s20, 0
    %p68 = por %p66, %p67
    %s70 = sadd.s32 %s69, 1
    %p73 = scmp.eq.s32.totalorder %s14, 1
    %p74 = scmp.ne.s32.totalorder %s69, %s71
    %p75 = scmp.eq.s32.totalorder %s14, 0
    %p76 = por %p74, %p75
    %p77 = scmp.ne.s32.totalorder %s69, %s71
    %p78 = scmp.eq.s32.totalorder %s19, 1
    %p79 = por %p77, %p78
    %p80 = scmp.ne.s32.totalorder %s71, %s72
    %p81 = scmp.eq.s32.totalorder %s19, 0
    %p82 = por %p80, %p81
    %p83 = scmp.ne.s32.totalorder %s71, %s72
    %p84 = scmp.eq.s32.totalorder %s20, 1
    %p85 = por %p83, %p84
    %p87 = scmp.ne.s32.totalorder %s72, %s86
    %p88 = scmp.eq.s32.totalorder %s20, 0
    %p89 = por %p87, %p88
    %s91 = sadd.s32 %s90, 1
    %p94 = scmp.eq.s32.totalorder %s14, 1
    %p95 = scmp.ne.s32.totalorder %s90, %s92
    %p96 = scmp.eq.s32.totalorder %s14, 0
    %p97 = por %p95, %p96
    %p98 = scmp.ne.s32.totalorder %s90, %s92
    %p99 = scmp.eq.s32.totalorder %s19, 1
    %p100 = por %p98, %p99
    %p101 = scmp.ne.s32.totalorder %s92, %s93
    %p102 = scmp.eq.s32.totalorder %s19, 0
    %p103 = por %p101, %p102
    %p104 = scmp.ne.s32.totalorder %s92, %s93
    %p105 = scmp.eq.s32.totalorder %s20, 1
    %p106 = por %p104, %p105
    %p108 = scmp.ne.s32.totalorder %s93, %s107
    %p109 = scmp.eq.s32.totalorder %s20, 0
    %p110 = por %p108, %p109
    %s112 = sadd.s32 %s111, 1
    %p115 = scmp.eq.s32.totalorder %s14, 1
    %p116 = scmp.ne.s32.totalorder %s111, %s113
    %p117 = scmp.eq.s32.totalorder %s14, 0
    %p118 = por %p116, %p117
    %p119 = scmp.ne.s32.totalorder %s111, %s113
    %p120 = scmp.eq.s32.totalorder %s19, 1
    %p121 = por %p119, %p120
    %p122 = scmp.ne.s32.totalorder %s113, %s114
    %p123 = scmp.eq.s32.totalorder %s19, 0
    %p124 = por %p122, %p123
    %p125 = scmp.ne.s32.totalorder %s113, %s114
    %p126 = scmp.eq.s32.totalorder %s20, 1
    %p127 = por %p125, %p126
    %p129 = scmp.ne.s32.totalorder %s114, %s128
    %p130 = scmp.eq.s32.totalorder %s20, 0
    %p131 = por %p129, %p130
    %s132 = ssub.s32 %s14, %s21
    %p133 = scmp.eq.s32.totalorder %s132, 0
    %s135 = sadd.s32 %s134, 1
    %s136 = scalar_select %p133, %s134, %s135
    %p139 = pneg %p133
    %p140 = scmp.eq.s32.totalorder %s14, 1
    %p141 = por %p139, %p140
    %p142 = scmp.ne.s32.totalorder %s134, %s137
    %p143 = scmp.eq.s32.totalorder %s14, 0
    %p144 = por %p142, %p143
    %p145 = scmp.ne.s32.totalorder %s134, %s137
    %p146 = scmp.eq.s32.totalorder %s19, 1
    %p147 = por %p145, %p146
    %p148 = scmp.ne.s32.totalorder %s137, %s138
    %p149 = scmp.eq.s32.totalorder %s19, 0
    %p150 = por %p148, %p149
    %p151 = scmp.ne.s32.totalorder %s137, %s138
    %p152 = scmp.eq.s32.totalorder %s20, 1
    %p153 = por %p151, %p152
    %p155 = scmp.ne.s32.totalorder %s138, %s154
    %p156 = scmp.eq.s32.totalorder %s20, 0
    %p157 = por %p155, %p156
    %s159 = sadd.s32 %s158, 1
    %p162 = scmp.eq.s32.totalorder %s14, 1
    %p163 = scmp.ne.s32.totalorder %s158, %s160
    %p164 = scmp.eq.s32.totalorder %s14, 0
    %p165 = por %p163, %p164
    %p166 = scmp.ne.s32.totalorder %s158, %s160
    %p167 = scmp.eq.s32.totalorder %s19, 1
    %p168 = por %p166, %p167
    %p169 = scmp.ne.s32.totalorder %s160, %s161
    %p170 = scmp.eq.s32.totalorder %s19, 0
    %p171 = por %p169, %p170
    %p172 = scmp.ne.s32.totalorder %s160, %s161
    %p173 = scmp.eq.s32.totalorder %s20, 1
    %p174 = por %p172, %p173
    %p176 = scmp.ne.s32.totalorder %s161, %s175
    %p177 = scmp.eq.s32.totalorder %s20, 0
    %p178 = por %p176, %p177
    %s180 = sadd.s32 %s179, 1
    %p183 = scmp.eq.s32.totalorder %s14, 1
    %p184 = scmp.ne.s32.totalorder %s179, %s181
    %p185 = scmp.eq.s32.totalorder %s14, 0
    %p186 = por %p184, %p185
    %p187 = scmp.ne.s32.totalorder %s179, %s181
    %p188 = scmp.eq.s32.totalorder %s19, 1
    %p189 = por %p187, %p188
    %p190 = scmp.ne.s32.totalorder %s181, %s182
    %p191 = scmp.eq.s32.totalorder %s19, 0
    %p192 = por %p190, %p191
    %p193 = scmp.ne.s32.totalorder %s181, %s182
    %p194 = scmp.eq.s32.totalorder %s20, 1
    %p195 = por %p193, %p194
    %p197 = scmp.ne.s32.totalorder %s182, %s196
    %p198 = scmp.eq.s32.totalorder %s20, 0
    %p199 = por %p197, %p198
    %s200 = ssub.s32 %s14, %s21
    %p201 = scmp.eq.s32.totalorder %s200, 0
    %s203 = sadd.s32 %s202, 1
    %s204 = scalar_select %p201, %s202, %s203
    %p207 = pneg %p201
    %p208 = scmp.eq.s32.totalorder %s14, 1
    %p209 = por %p207, %p208
    %p210 = scmp.ne.s32.totalorder %s202, %s205
    %p211 = scmp.eq.s32.totalorder %s14, 0
    %p212 = por %p210, %p211
    %p213 = scmp.ne.s32.totalorder %s202, %s205
    %p214 = scmp.eq.s32.totalorder %s19, 1
    %p215 = por %p213, %p214
    %p216 = scmp.ne.s32.totalorder %s205, %s206
    %p217 = scmp.eq.s32.totalorder %s19, 0
    %p218 = por %p216, %p217
    %p219 = scmp.ne.s32.totalorder %s205, %s206
    %p220 = scmp.eq.s32.totalorder %s20, 1
    %p221 = por %p219, %p220
    %p223 = scmp.ne.s32.totalorder %s206, %s222
    %p224 = scmp.eq.s32.totalorder %s20, 0
    %p225 = por %p223, %p224
    %p226 = scmp.le.s32.totalorder 1, %s14
    %p227 = scmp.lt.s32.totalorder %s14, 3
    %p228 = pnand %p226, %p227
    %p229 = pneg %p228
    // Predicated region
    $region9: #{forward.3} parent=5 // pred_check
      _
    $region10: #{forward.3} parent=5 // pred_check_branch
      %231 = sbr.rel (%p228) target = $region12
    $region11: #{forward.3} parent=5 // pred_region
      %s232 = ssub.s32 %s14, 1
      // Predicated region
      $region13: #{forward.3} parent=11 // pred_check
        %p233 = pneg %p61
      $region14: #{forward.3} parent=11 // pred_check_branch
        %235 = sbr.rel (%p233) target = $region16
      $region15: #{forward.3} parent=11 // pred_region
        _
      $region16: #{forward.3} parent=11 // pred_fallthru
        _
      // Predicated region
      $region17: #{forward.3} parent=11 // pred_check
        %p236 = pneg %p82
      $region18: #{forward.3} parent=11 // pred_check_branch
        %238 = sbr.rel (%p236) target = $region20
      $region19: #{forward.3} parent=11 // pred_region
        _
      $region20: #{forward.3} parent=11 // pred_fallthru
        _
      // Predicated region
      $region21: #{forward.3} parent=11 // pred_check
        %p239 = pneg %p103
      $region22: #{forward.3} parent=11 // pred_check_branch
        %241 = sbr.rel (%p239) target = $region24
      $region23: #{forward.3} parent=11 // pred_region
        _
      $region24: #{forward.3} parent=11 // pred_fallthru
        _
      // Predicated region
      $region25: #{forward.3} parent=11 // pred_check
        %p242 = pneg %p124
      $region26: #{forward.3} parent=11 // pred_check_branch
        %244 = sbr.rel (%p242) target = $region28
      $region27: #{forward.3} parent=11 // pred_region
        _
      $region28: #{forward.3} parent=11 // pred_fallthru
        _
      // Predicated region
      $region29: #{forward.3} parent=11 // pred_check
        %p245 = pneg %p171
      $region30: #{forward.3} parent=11 // pred_check_branch
        %247 = sbr.rel (%p245) target = $region32
      $region31: #{forward.3} parent=11 // pred_region
        _
      $region32: #{forward.3} parent=11 // pred_fallthru
        _
      // Predicated region
      $region33: #{forward.3} parent=11 // pred_check
        %p248 = pneg %p192
      $region34: #{forward.3} parent=11 // pred_check_branch
        %250 = sbr.rel (%p248) target = $region36
      $region35: #{forward.3} parent=11 // pred_region
        _
      $region36: #{forward.3} parent=11 // pred_fallthru
        _
    $region12: #{forward.3} parent=5 // pred_fallthru
      _
    %p251 = scmp.lt.s32.totalorder %s14, 2
    // Predicated region
    $region37: #{forward.3} parent=5 // pred_check
      %p252 = pneg %p251
    $region38: #{forward.3} parent=5 // pred_check_branch
      %254 = sbr.rel (%p252) target = $region40
    $region39: #{forward.3} parent=5 // pred_region
      // Predicated region
      $region41: #{forward.3} parent=39 // pred_check
        %p255 = pneg %p34
      $region42: #{forward.3} parent=39 // pred_check_branch
        %257 = sbr.rel (%p255) target = $region44
      $region43: #{forward.3} parent=39 // pred_region
        %p258 = scmp.lt.s32.totalorder %s14, 1
        %s259 = scalar_select %p258, %s14, 1
        %s260 = smul.addr %s259, 2
        %s261 = smul.addr %s260, 8
        %s262 = scalar_lea.vmem %s0, %s261
      $region44: #{forward.3} parent=39 // pred_fallthru
        _
      // Predicated region
      $region45: #{forward.3} parent=39 // pred_check
        %p263 = pneg %p144
      $region46: #{forward.3} parent=39 // pred_check_branch
        %265 = sbr.rel (%p263) target = $region48
      $region47: #{forward.3} parent=39 // pred_region
        %p266 = scmp.lt.s32.totalorder %s14, 1
        %s267 = scalar_select %p266, %s14, 1
        %s268 = smul.addr %s267, 2
        %s269 = smul.addr %s268, 8
        %s270 = scalar_lea.vmem %s5, %s269
      $region48: #{forward.3} parent=39 // pred_fallthru
        _
    $region40: #{forward.3} parent=5 // pred_fallthru
      _
    %p271 = scmp.le.s32.totalorder 1, %s14
    %p272 = scmp.lt.s32.totalorder %s14, 3
    %p273 = pnand %p271, %p272
    %p274 = pneg %p273
    // Predicated region
    $region49: #{forward.3} parent=5 // pred_check
      _
    $region50: #{forward.3} parent=5 // pred_check_branch
      %276 = sbr.rel (%p273) target = $region52
    $region51: #{forward.3} parent=5 // pred_region
      %s277 = ssub.s32 %s14, 1
      %p278 = scmp.lt.s32.totalorder %s19, 1
      %s279 = scalar_select %p278, %s19, 1
      %s280 = smul.addr %s279, 2
      %s281 = smul.addr %s280, 8
      %s282 = scalar_lea.vmem %s0, %s281
      %p283 = pneg %p40
      %p284 = pneg %p37
      %p285 = pneg %p61
      %p286 = pneg %p58
      %p287 = pneg %p82
      %p288 = pneg %p79
      %p289 = pneg %p103
      %p290 = pneg %p100
      %p291 = pneg %p124
      %p292 = pneg %p121
      %p293 = scmp.lt.s32.totalorder %s19, 1
      %s294 = scalar_select %p293, %s19, 1
      %s295 = smul.addr %s294, 2
      %s296 = smul.addr %s295, 8
      %s297 = scalar_lea.vmem %s5, %s296
      %p298 = pneg %p150
      %p299 = pneg %p147
      %p300 = pneg %p171
      %p301 = pneg %p168
      %p302 = pneg %p192
      %p303 = pneg %p189
      %p304 = pneg %p218
      %p305 = pneg %p215
      %p306 = scmp.lt.s32.totalorder %s19, 1
      %s307 = scalar_select %p306, %s19, 1
      %s308 = smul.addr %s307, 2
      %s309 = smul.addr %s308, 8
      %s310 = scalar_lea.vmem %s8, %s309
      %p311 = scmp.lt.s32.totalorder %s19, 1
      %s312 = scalar_select %p311, %s19, 1
      %s313 = smul.addr %s312, 2
      %s314 = smul.addr %s313, 8
      %s315 = scalar_lea.vmem %s0, %s314
      %p316 = scmp.lt.s32.totalorder %s19, 1
      %s317 = scalar_select %p316, %s19, 1
      %s318 = smul.addr %s317, 2
      %s319 = smul.addr %s318, 8
      %s320 = scalar_lea.vmem %s5, %s319
      %p321 = scmp.lt.s32.totalorder %s19, 1
      %s322 = scalar_select %p321, %s19, 1
      %s323 = smul.addr %s322, 2
      %s324 = smul.addr %s323, 8
      %s325 = scalar_lea.vmem %s8, %s324
      %v327 = vld [vmem:[%s315] sm:$0xff]
      %v328 = vld [vmem:[%s315 + $0x8] sm:$0xff]
      %v329 = vld [vmem:[%s1] sm:$0x1]
      %v331 = vperm.slane %v329, 0
      %v333 = vmul.f32 %v327, %v331
      %v334 = vmul.f32 %v328, %v331
      %v335 = vld [vmem:[%s2] sm:$0x1]
      %v337 = vperm.slane %v335, 0
      %v339 = vadd.f32 %v333, %v337
      %v340 = vadd.f32 %v334, %v337
      %v341 = vmul.f32 %v339, 0.5
      %v342 = vmul.f32 %v340, 0.5
      %v343 = vmul.f32 %v339, 0.70710677
      %v344 = vmul.f32 %v340, 0.70710677
      %v345 = vmul.f32 %v343, %v343
      %v346 = vmin.f32 16.0, %v345
      %v347 = vmul.f32 %v346, 2.1237322e-06
      %v348 = vadd.f32 %v347, 0.00028619796
      %v349 = vmul.f32 %v346, %v348
      %v350 = vadd.f32 %v349, 0.0036580483
      %v351 = vmul.f32 %v346, %v350
      %v352 = vadd.f32 %v351, 0.05243302
      %v353 = vmul.f32 %v346, %v352
      %v354 = vadd.f32 %v353, 0.18741608
      %v355 = vmul.f32 %v346, %v354
      %v356 = vadd.f32 %v355, 1.1283791
      %v357 = vmul.f32 %v343, %v356
      %v358 = vmul.f32 %v346, 3.8918573e-05
      %v359 = vadd.f32 %v358, 0.001143296
      %v360 = vmul.f32 %v346, %v359
      %v361 = vadd.f32 %v360, 0.014752088
      %v362 = vmul.f32 %v346, %v361
      %v363 = vadd.f32 %v362, 0.112945676
      %v364 = vmul.f32 %v346, %v363
      %v365 = vadd.f32 %v364, 0.4994258
      %v366 = vmul.f32 %v346, %v365
      %v367 = vadd.f32 %v366, 1.0
      %v368 = vrcp.pop %v367
      %v369 = vmul.f32 %v367, %v368
      %v370 = vsub.f32 1.0, %v369
      %v371 = vmul.f32 %v368, %v370
      %v372 = vadd.f32 %v368, %v371
      %vm373 = vweird.f32 %v367
      %vm374 = vweird.f32 %v368
      %vm375 = vmor %vm373, %vm374
      %v376 = vsel %vm375, %v368, %v372
      %v377 = vand.u32 2147483647, %v367
      %vm378 = vcmp.eq.f32.partialorder %v377, 8.507059e+37
      %v379 = vand.u32 %v367, 2147483648
      %v380 = vor.u32 1.1754944e-38, %v379
      %v381 = vsel %vm378, %v380, %v376
      %v382 = vmul.f32 %v357, %v381
      %v383 = vmin.f32 %v382, 1.0
      %v384 = vmax.f32 %v383, -1.0
      %v385 = vmul.f32 %v344, %v344
      %v386 = vmin.f32 16.0, %v385
      %v387 = vmul.f32 %v386, 2.1237322e-06
      %v388 = vadd.f32 %v387, 0.00028619796
      %v389 = vmul.f32 %v386, %v388
      %v390 = vadd.f32 %v389, 0.0036580483
      %v391 = vmul.f32 %v386, %v390
      %v392 = vadd.f32 %v391, 0.05243302
      %v393 = vmul.f32 %v386, %v392
      %v394 = vadd.f32 %v393, 0.18741608
      %v395 = vmul.f32 %v386, %v394
      %v396 = vadd.f32 %v395, 1.1283791
      %v397 = vmul.f32 %v344, %v396
      %v398 = vmul.f32 %v386, 3.8918573e-05
      %v399 = vadd.f32 %v398, 0.001143296
      %v400 = vmul.f32 %v386, %v399
      %v401 = vadd.f32 %v400, 0.014752088
      %v402 = vmul.f32 %v386, %v401
      %v403 = vadd.f32 %v402, 0.112945676
      %v404 = vmul.f32 %v386, %v403
      %v405 = vadd.f32 %v404, 0.4994258
      %v406 = vmul.f32 %v386, %v405
      %v407 = vadd.f32 %v406, 1.0
      %v408 = vrcp.pop %v407
      %v409 = vmul.f32 %v407, %v408
      %v410 = vsub.f32 1.0, %v409
      %v411 = vmul.f32 %v408, %v410
      %v412 = vadd.f32 %v408, %v411
      %vm413 = vweird.f32 %v407
      %vm414 = vweird.f32 %v408
      %vm415 = vmor %vm413, %vm414
      %v416 = vsel %vm415, %v408, %v412
      %v417 = vand.u32 2147483647, %v407
      %vm418 = vcmp.eq.f32.partialorder %v417, 8.507059e+37
      %v419 = vand.u32 %v407, 2147483648
      %v420 = vor.u32 1.1754944e-38, %v419
      %v421 = vsel %vm418, %v420, %v416
      %v422 = vmul.f32 %v397, %v421
      %v423 = vmin.f32 %v422, 1.0
      %v424 = vmax.f32 %v423, -1.0
      %v425 = vadd.f32 %v384, 1.0
      %v426 = vadd.f32 %v424, 1.0
      %v427 = vmul.f32 %v341, %v425
      %v428 = vmul.f32 %v342, %v426
      %v429 = vpack.c.bf16 %v428, %v427
      %v430 = vld [vmem:[%s3] sm:$0xff]
      %v431 = vld [vmem:[%s3 + $0x8] sm:$0xf]
      %v432 = vld [vmem:[%s3 + $0xc] sm:$0xff]
      %v433 = vld [vmem:[%s3 + $0x14] sm:$0xf]
      %v434 = vld [vmem:[%s3 + $0x18] sm:$0xff]
      %v435 = vld [vmem:[%s3 + $0x20] sm:$0xf]
      %v436 = vld [vmem:[%s3 + $0x24] sm:$0xff]
      %v437 = vld [vmem:[%s3 + $0x2c] sm:$0xf]
      %v438 = vld [vmem:[%s3 + $0x30] sm:$0xff]
      %v439 = vld [vmem:[%s3 + $0x38] sm:$0xf]
      %v440 = vld [vmem:[%s3 + $0x3c] sm:$0xff]
      %v441 = vld [vmem:[%s3 + $0x44] sm:$0xf]
      %v442 = vld [vmem:[%s3 + $0x48] sm:$0xff]
      %v443 = vld [vmem:[%s3 + $0x50] sm:$0xf]
      %v444 = vld [vmem:[%s3 + $0x54] sm:$0xff]
      %v445 = vld [vmem:[%s3 + $0x5c] sm:$0xf]
      %v446 = vld [vmem:[%s3 + $0x60] sm:$0xff]
      %v447 = vld [vmem:[%s3 + $0x68] sm:$0xf]
      %v448 = vld [vmem:[%s3 + $0x6c] sm:$0xff]
      %v449 = vld [vmem:[%s3 + $0x74] sm:$0xf]
      %v450 = vld [vmem:[%s3 + $0x78] sm:$0xff]
      %v451 = vld [vmem:[%s3 + $0x80] sm:$0xf]
      %v452 = vld [vmem:[%s3 + $0x84] sm:$0xff]
      %v453 = vld [vmem:[%s3 + $0x8c] sm:$0xf]
      %v454 = vld [vmem:[%s3 + $0x90] sm:$0xff]
      %v455 = vld [vmem:[%s3 + $0x98] sm:$0xf]
      %v456 = vld [vmem:[%s3 + $0x9c] sm:$0xff]
      %v457 = vld [vmem:[%s3 + $0xa4] sm:$0xf]
      %v458 = vld [vmem:[%s3 + $0xa8] sm:$0xff]
      %v459 = vld [vmem:[%s3 + $0xb0] sm:$0xf]
      %v460 = vld [vmem:[%s3 + $0xb4] sm:$0xff]
      %v461 = vld [vmem:[%s3 + $0xbc] sm:$0xf]
      %v494 = vunpack.c.l.b16 %v430
      %v495 = vunpack.c.h.b16 %v430
      %v496 = vunpack.c.l.b16 %v431
      %v497 = vunpack.c.l.b16 %v432
      %v498 = vunpack.c.h.b16 %v432
      %v499 = vunpack.c.l.b16 %v433
      %v500 = vunpack.c.l.b16 %v434
      %v501 = vunpack.c.h.b16 %v434
      %v502 = vunpack.c.l.b16 %v435
      %v503 = vunpack.c.l.b16 %v436
      %v504 = vunpack.c.h.b16 %v436
      %v505 = vunpack.c.l.b16 %v437
      %v506 = vunpack.c.l.b16 %v438
      %v507 = vunpack.c.h.b16 %v438
      %v508 = vunpack.c.l.b16 %v439
      %v509 = vunpack.c.l.b16 %v440
      %v510 = vunpack.c.h.b16 %v440
      %v511 = vunpack.c.l.b16 %v441
      %v512 = vunpack.c.l.b16 %v442
      %v513 = vunpack.c.h.b16 %v442
      %v514 = vunpack.c.l.b16 %v443
      %v515 = vunpack.c.l.b16 %v444
      %v516 = vunpack.c.h.b16 %v444
      %v517 = vunpack.c.l.b16 %v445
      %v518 = vunpack.c.l.b16 %v446
      %v519 = vunpack.c.h.b16 %v446
      %v520 = vunpack.c.l.b16 %v447
      %v521 = vunpack.c.l.b16 %v448
      %v522 = vunpack.c.h.b16 %v448
      %v523 = vunpack.c.l.b16 %v449
      %v524 = vunpack.c.l.b16 %v450
      %v525 = vunpack.c.h.b16 %v450
      %v526 = vunpack.c.l.b16 %v451
      %v527 = vunpack.c.l.b16 %v452
      %v528 = vunpack.c.h.b16 %v452
      %v529 = vunpack.c.l.b16 %v453
      %v530 = vunpack.c.l.b16 %v454
      %v531 = vunpack.c.h.b16 %v454
      %v532 = vunpack.c.l.b16 %v455
      %v533 = vunpack.c.l.b16 %v456
      %v534 = vunpack.c.h.b16 %v456
      %v535 = vunpack.c.l.b16 %v457
      %v536 = vunpack.c.l.b16 %v458
      %v537 = vunpack.c.h.b16 %v458
      %v538 = vunpack.c.l.b16 %v459
      %v539 = vunpack.c.l.b16 %v460
      %v540 = vunpack.c.h.b16 %v460
      %v541 = vunpack.c.l.b16 %v461
      %v542 = vpack.c.b16 %v497, %v494
      %v543 = vpack.c.b16 %v498, %v495
      %v544 = vpack.c.b16 %v499, %v496
      %v545 = vpack.c.b16 %v503, %v500
      %v546 = vpack.c.b16 %v504, %v501
      %v547 = vpack.c.b16 %v505, %v502
      %v548 = vpack.c.b16 %v509, %v506
      %v549 = vpack.c.b16 %v510, %v507
      %v550 = vpack.c.b16 %v511, %v508
      %v551 = vpack.c.b16 %v515, %v512
      %v552 = vpack.c.b16 %v516, %v513
      %v553 = vpack.c.b16 %v517, %v514
      %v554 = vpack.c.b16 %v521, %v518
      %v555 = vpack.c.b16 %v522, %v519
      %v556 = vpack.c.b16 %v523, %v520
      %v557 = vpack.c.b16 %v527, %v524
      %v558 = vpack.c.b16 %v528, %v525
      %v559 = vpack.c.b16 %v529, %v526
      %v560 = vpack.c.b16 %v533, %v530
      %v561 = vpack.c.b16 %v534, %v531
      %v562 = vpack.c.b16 %v535, %v532
      %v563 = vpack.c.b16 %v539, %v536
      %v564 = vpack.c.b16 %v540, %v537
      %v565 = vpack.c.b16 %v541, %v538
      %590 = vmatpush.bf16.msra.mxu0 %v563
      %591 = vmatpush.bf16.msra.mxu0 %v560
      %592 = vmatpush.bf16.msra.mxu0 %v557
      %593 = vmatpush.bf16.msra.mxu0 %v554
      %594 = vmatpush.bf16.msra.mxu0 %v551
      %595 = vmatpush.bf16.msra.mxu0 %v548
      %596 = vmatpush.bf16.msra.mxu0 %v545
      %597 = vmatpush.bf16.msra.mxu0 %v542
      %598 = vmatmul.bf16.gmra.mxu0 %v429
      %v599 = vpop.f32.mrf.mxu0
      %v600 = vadd.f32 0.0, %v599
      %v601 = vpop.f32.mrf.mxu0
      %v602 = vadd.f32 0.0, %v601
      %603 = vdwg.mxu0
      %604 = vmatpush.bf16.msra.mxu0 %v564
      %605 = vmatpush.bf16.msra.mxu0 %v561
      %606 = vmatpush.bf16.msra.mxu0 %v558
      %607 = vmatpush.bf16.msra.mxu0 %v555
      %608 = vmatpush.bf16.msra.mxu0 %v552
      %609 = vmatpush.bf16.msra.mxu0 %v549
      %610 = vmatpush.bf16.msra.mxu0 %v546
      %611 = vmatpush.bf16.msra.mxu0 %v543
      %612 = vmatmul.bf16.gmra.mxu0 %v429
      %v613 = vpop.f32.mrf.mxu0
      %v614 = vadd.f32 0.0, %v613
      %v615 = vpop.f32.mrf.mxu0
      %v616 = vadd.f32 0.0, %v615
      %617 = vdwg.mxu0
      %618 = vmatpush.bf16.msra.mxu0 %v565
      %619 = vmatpush.bf16.msra.mxu0 %v562
      %620 = vmatpush.bf16.msra.mxu0 %v559
      %621 = vmatpush.bf16.msra.mxu0 %v556
      %622 = vmatpush.bf16.msra.mxu0 %v553
      %623 = vmatpush.bf16.msra.mxu0 %v550
      %624 = vmatpush.bf16.msra.mxu0 %v547
      %625 = vmatpush.bf16.msra.mxu0 %v544
      %626 = vmatmul.bf16.gmra.mxu0 %v429
      %v627 = vpop.f32.mrf.mxu0
      %v628 = vadd.f32 0.0, %v627
      %v629 = vpop.f32.mrf.mxu0
      %v630 = vadd.f32 0.0, %v629
      %631 = vdwg.mxu0
      %vm634 = vcmask 1040384
      %v635 = vrot.slane %v600, 7
      %v636 = vrot.slane %v602, 7
      %v637 = vsel %vm634, %v635, %v636
      %v640 = vsel %vm634, 0.0, %v635
      %v641 = vadd.f32 %v614, %v640
      %v642 = vadd.f32 %v616, %v637
      %vm645 = vcmask 1046528
      %v646 = vrot.slane %v628, 1
      %v647 = vrot.slane %v630, 1
      %v648 = vsel %vm645, %v646, %v647
      %v651 = vsel %vm645, %v647, 0.0
      %v652 = vadd.f32 %v641, %v648
      %v653 = vadd.f32 %v642, %v651
      %v654 = vld [vmem:[%s4] sm:$0x1]
      %v656 = vperm.slane %v654, 0
      %v658 = vadd.f32 %v652, %v656
      %v659 = vadd.f32 %v653, %v656
      %v660 = vld [vmem:[%s320] sm:$0xff]
      %v661 = vld [vmem:[%s320 + $0x8] sm:$0xff]
      %v662 = vpack.c.bf16 %v661, %v660
      %v663 = vld [vmem:[%s6] sm:$0xf]
      %v664 = vld [vmem:[%s6 + $0x4] sm:$0xf]
      %v665 = vld [vmem:[%s6 + $0x8] sm:$0xf]
      %v666 = vld [vmem:[%s6 + $0xc] sm:$0xf]
      %v667 = vld [vmem:[%s6 + $0x10] sm:$0xf]
      %v668 = vld [vmem:[%s6 + $0x14] sm:$0xf]
      %v669 = vld [vmem:[%s6 + $0x18] sm:$0xf]
      %v670 = vld [vmem:[%s6 + $0x1c] sm:$0xf]
      %v671 = vld [vmem:[%s7] sm:$0x1]
      %v673 = vperm.slane %v671, 0
      %v683 = vunpack.c.l.b16 %v663
      %v684 = vunpack.c.l.b16 %v664
      %v685 = vunpack.c.l.b16 %v665
      %v686 = vunpack.c.l.b16 %v666
      %v687 = vunpack.c.l.b16 %v667
      %v688 = vunpack.c.l.b16 %v668
      %v689 = vunpack.c.l.b16 %v669
      %v690 = vunpack.c.l.b16 %v670
      %v691 = vpack.c.b16 %v684, %v683
      %v692 = vpack.c.b16 %v686, %v685
      %v693 = vpack.c.b16 %v688, %v687
      %v694 = vpack.c.b16 %v690, %v689
      %vm699 = vcmask 523264
      %v701 = vsel %vm699, %v662, 0
      %703 = vmatpush.bf16.msra.mxu0 0
      %704 = vmatpush.bf16.msra.mxu0 0
      %705 = vmatpush.bf16.msra.mxu0 0
      %706 = vmatpush.bf16.msra.mxu0 0
      %707 = vmatpush.bf16.msra.mxu0 %v694
      %708 = vmatpush.bf16.msra.mxu0 %v693
      %709 = vmatpush.bf16.msra.mxu0 %v692
      %710 = vmatpush.bf16.msra.mxu0 %v691
      %711 = vmatmul.bf16.gmra.mxu0 %v701
      %v712 = vpop.f32.mrf.mxu0
      %v713 = vadd.f32 %v673, %v712
      %v714 = vpop.f32.mrf.mxu0
      %v715 = vadd.f32 %v673, %v714
      %716 = vdwg.mxu0
      %v717 = vadd.f32 %v658, %v713
      %v718 = vadd.f32 %v659, %v715
      %719 = vst [vmem:[%s325] sm:$0xff] %v717
      %720 = vst [vmem:[%s325 + $0x8] sm:$0xff] %v718
      %p721 = scmp.lt.s32.totalorder %s19, 1
      %s722 = scalar_select %p721, %s19, 1
      %s723 = smul.addr %s722, 2
      %s724 = smul.addr %s723, 8
      %s725 = scalar_lea.vmem %s8, %s724
      // Predicated region
      $region53: #{forward.3} parent=51 // pred_check
        %p726 = pneg %p215
      $region54: #{forward.3} parent=51 // pred_check_branch
        %728 = sbr.rel (%p726) target = $region56
      $region55: #{forward.3} parent=51 // pred_region
        _
      $region56: #{forward.3} parent=51 // pred_fallthru
        _
    $region52: #{forward.3} parent=5 // pred_fallthru
      _
    %p729 = scmp.le.s32.totalorder 2, %s14
    // Predicated region
    $region57: #{forward.3} parent=5 // pred_check
      %p730 = pneg %p729
    $region58: #{forward.3} parent=5 // pred_check_branch
      %732 = sbr.rel (%p730) target = $region60
    $region59: #{forward.3} parent=5 // pred_region
      %s733 = ssub.s32 %s14, 2
      // Predicated region
      $region61: #{forward.3} parent=59 // pred_check
        %p734 = pneg %p221
      $region62: #{forward.3} parent=59 // pred_check_branch
        %736 = sbr.rel (%p734) target = $region64
      $region63: #{forward.3} parent=59 // pred_region
        %p737 = scmp.lt.s32.totalorder %s20, 1
        %s738 = scalar_select %p737, %s20, 1
        %s739 = smul.addr %s738, 2
        %s740 = smul.addr %s739, 8
        %s741 = scalar_lea.vmem %s8, %s740
      $region64: #{forward.3} parent=59 // pred_fallthru
        _
    $region60: #{forward.3} parent=5 // pred_fallthru
      _
  $region6: #{forward.3} parent=0 // loop_footer
    %s18 = sadd.s32 1, %s14
  $region7: #{forward.3} parent=0 // loop_footer_branch
    %13 = sbr.rel target = $region3
  $region8: #{forward.3} parent=0 // loop_exit
    _

</llo_original>
